<compile_context>
chip_gen: v5e
topology: v5e:2x2
jax: 0.10.0
libtpu: 0.0.40
codegen_flags: <defaults>
</compile_context>

<pallas_src>
import functools

import numpy as np
import jax
import jax.numpy as jnp
from jax.experimental import pallas as pl
from jax.experimental.pallas import tpu as pltpu


# ---------------------------------------------------------------------------
# Host-side operand construction (plain numpy)
# ---------------------------------------------------------------------------
def _convt_matrix(w, h_in, w_in, stride, pad):
    """Dense GEMM operand equivalent to ConvTranspose2d with this geometry.

    w: (Cin, Cout, KH, KW) (PyTorch ConvTranspose2d weight layout).
    Returns M of shape (Cin*Hin*Win, Cout*Hout*Wout) such that
      y_flat = x_flat @ M  ==  F.conv_transpose2d(x, w, stride, pad) flattened.
    """
    cin, cout, kh, kw = w.shape
    h_out = (h_in - 1) * stride - 2 * pad + kh
    w_out = (w_in - 1) * stride - 2 * pad + kw
    m = np.zeros((cin, h_in, w_in, cout, h_out, w_out), dtype=np.float32)
    for ih in range(h_in):
        for iw in range(w_in):
            for r in range(kh):
                oh = ih * stride - pad + r
                if oh < 0 or oh >= h_out:
                    continue
                for c in range(kw):
                    ow = iw * stride - pad + c
                    if ow < 0 or ow >= w_out:
                        continue
                    m[:, ih, iw, :, oh, ow] = w[:, :, r, c]
    return m.reshape(cin * h_in * w_in, cout * h_out * w_out), (h_out, w_out)


def init_params(rng, in_size, ch, output_size):
    def w(*shape, scale=0.1):
        return (scale * rng.standard_normal(shape)).astype(np.float32)

    params = {}
    conv_defs = [
        ("l1", in_size, ch * 8, 4, 1, 0),
        ("l2", ch * 8, ch * 4, 4, 2, 1),
        ("l3", ch * 4, ch * 2, 3, 1, 4),
        ("l4", ch * 2, ch, 3, 2, 2),
    ]
    for name, cin, cout, k, stride, pad in conv_defs:
        params[name] = dict(
            weight=w(cin, cout, k, k),
            gamma=(1.0 + 0.1 * rng.standard_normal(cout)).astype(np.float32),
            beta=w(cout),
            mean=w(cout),
            var=(1.0 + 0.1 * np.abs(rng.standard_normal(cout))).astype(np.float32),
            stride=stride,
            pad=pad,
        )
    params["fc1"] = dict(weight=w(ch * 2, ch), bias=w(ch * 2))
    params["fc2"] = dict(weight=w(ch * 4, ch * 2), bias=w(ch * 4))
    params["fc3"] = dict(weight=w(output_size, ch * 4), bias=w(output_size))
    return params


def _round_up(v, m):
    return -(-int(v) // m) * m


def build_operands(params, eps=1e-5, weight_dtype=jnp.bfloat16):
    """Build the fused kernel operands.

    Returns (operands, in_pad, out_pad):
      operands = [m1, t1, m2, t2, m3, t3, m4, t4, w1, b1, w2, b2, w3, b3]
      in_pad   = padded K of the first GEMM (latent width rounded up to 8)
      out_pad  = padded width of the kernel output (slice to output_size)
    """
    mats, vecs = [], []

    # Conv stages: GEMM matrix with BN scale folded in; keep only the shift.
    h = w_sp = 1
    for name in ("l1", "l2", "l3", "l4"):
        p = params[name]
        m, (h, w_sp) = _convt_matrix(p["weight"], h, w_sp, p["stride"], p["pad"])
        scale_c = p["gamma"] / np.sqrt(p["var"] + eps)
        shift_c = p["beta"] - p["mean"] * scale_c
        scale = np.repeat(scale_c, h * w_sp).astype(np.float32)
        shift = np.repeat(shift_c, h * w_sp).astype(np.float32)
        mats.append((m * scale[None, :]).astype(np.float32))  # fold BN scale
        vecs.append(shift)

    # Prune structurally-dead conv outputs: a column of m_i whose matching row
    # of m_{i+1} is all-zero never influences the result (LeakyReLU + shift are
    # elementwise), so drop it together with its shift entry and the zero row.
    for i in range(len(mats) - 1):
        alive = np.any(mats[i + 1] != 0.0, axis=1)
        if not alive.all():
            mats[i] = mats[i][:, alive]
            vecs[i] = vecs[i][alive]
            mats[i + 1] = mats[i + 1][alive, :]

    # MLP head.
    for name in ("fc1", "fc2", "fc3"):
        p = params[name]
        mats.append(np.ascontiguousarray(p["weight"].T).astype(np.float32))
        vecs.append(p["bias"].astype(np.float32))

    # First-GEMM K: keep the true latent width (rounded to 8 sublanes only).
    # The x block's last dim equals the full-array dim, so the 128-lane rule
    # does not apply there, and ~94% zero contraction rows are removed.
    in_pad = _round_up(mats[0].shape[0], 8)
    prev_out_pad = in_pad
    operands = []
    for m, t in zip(mats, vecs):
        k, n_out = m.shape
        k_pad, n_pad = prev_out_pad, _round_up(n_out, 128)
        mp = np.zeros((k_pad, n_pad), np.float32)
        mp[:k, :n_out] = m
        tp = np.zeros((1, n_pad), np.float32)
        tp[0, :n_out] = t
        # Matrices in weight_dtype (bf16 for HBM bytes / MXU), vectors stay f32
        # (negligible bytes; cast in-kernel if bf16 elementwise is used).
        operands += [jnp.asarray(mp, dtype=weight_dtype), jnp.asarray(tp)]
        prev_out_pad = n_pad
    return operands, in_pad, prev_out_pad


# ---------------------------------------------------------------------------
# Pallas kernel: whole forward pass fused, weights resident in VMEM
# ---------------------------------------------------------------------------
def _generator_kernel(slope, act_dtype,
                      x_ref,
                      m1_ref, t1_ref, m2_ref, t2_ref,
                      m3_ref, t3_ref, m4_ref, t4_ref,
                      w1_ref, b1_ref, w2_ref, b2_ref, w3_ref, b3_ref,
                      out_ref):
    use_max = 0.0 <= slope < 1.0  # static (trace-time) choice

    def lrelu(v):
        if use_max:
            return jnp.maximum(v, v * slope)      # 2 VALU ops / element
        return jnp.where(v >= 0, v, v * slope)    # general slope fallback

    def stage(a, m_ref, v_ref):
        # MXU matmul in the weight dtype with f32 accumulation; bias-add +
        # LeakyReLU in act_dtype (bf16 on chips with bf16 VALUs, f32 else).
        # act_dtype is also what feeds the next dot -> no extra cast there.
        acc = jnp.dot(a.astype(m_ref.dtype), m_ref[...],
                      preferred_element_type=jnp.float32)
        y = acc.astype(act_dtype) + v_ref[...].astype(act_dtype)
        return lrelu(y)

    y = x_ref[...]                     # (block_n, in_pad) f32
    y = stage(y, m1_ref, t1_ref)       # conv1 + BN + lrelu
    y = stage(y, m2_ref, t2_ref)       # conv2 + BN + lrelu (dead cols pruned)
    y = stage(y, m3_ref, t3_ref)       # conv3 + BN + lrelu
    y = stage(y, m4_ref, t4_ref)       # conv4 + BN + lrelu (== squeeze)
    y = stage(y, w1_ref, b1_ref)       # fc1 + lrelu
    y = stage(y, w2_ref, b2_ref)       # fc2 + lrelu
    # Final stage: always f32 accumulate + f32 tanh (accuracy of the output).
    acc = jnp.dot(y.astype(w3_ref.dtype), w3_ref[...],
                  preferred_element_type=jnp.float32)
    out_ref[...] = jnp.tanh(acc + b3_ref[...]).astype(out_ref.dtype)


# ---------------------------------------------------------------------------
# Host wrapper
# ---------------------------------------------------------------------------
def _device_kind():
    try:
        return jax.devices()[0].device_kind.lower()
    except Exception:
        return ""


def _plan_batch(n, max_block=1024, want_multi_step=False):
    """Pick (n_pad, block_n, steps): n_pad = steps*block_n >= n, block_n % 8 == 0."""
    n8 = _round_up(max(int(n), 1), 8)
    steps = max(1, -(-n8 // max_block))
    if want_multi_step and n8 > 8:
        steps = max(steps, 2)           # v7x: let "parallel" span both TCs
    block_n = _round_up(-(-n8 // steps), 8)
    return block_n * steps, block_n, steps


def generator_forward(x, operands, slope, output_shape, in_pad, out_pad,
                      out_dtype=jnp.float32, max_block=1024):
    n = x.shape[0]
    out_size = int(np.prod(output_shape))
    x_flat = x.reshape(n, -1).astype(jnp.float32)
    k = x_flat.shape[1]

    kind = _device_kind()
    # bf16 elementwise only where the VPU is natively bf16 (v6e "Trillium",
    # v7x); v5e and older keep the f32 elementwise path.  Only used when the
    # weights themselves are bf16 (keeps the f32 validation path bit-tight).
    bf16_vpu = any(tag in kind for tag in ("v6", "v7", "trillium"))
    weights_bf16 = operands[0].dtype.name == "bfloat16"
    act_dtype = jnp.bfloat16 if (weights_bf16 and bf16_vpu) else jnp.float32

    # Adaptive batch tiling: multiple-of-8 padding only, <= max_block rows per
    # grid step; >= 2 steps on v7x so both TensorCores get work.
    n_pad, block_n, steps = _plan_batch(n, max_block=max_block,
                                        want_multi_step=("v7" in kind))

    x_p = jnp.zeros((n_pad, in_pad), jnp.float32).at[:n, :k].set(x_flat)

    kernel = functools.partial(_generator_kernel, float(slope), act_dtype)

    def run(single_buffer_weights):
        if single_buffer_weights:
            # Constant index_map -> weights stay resident; single-buffer them
            # to halve their VMEM footprint (matters as ch grows, esp. on
            # v7x's 64 MiB VMEM).
            wspecs = [pl.BlockSpec(op.shape, lambda i: (0, 0),
                                   pipeline_mode=pl.Buffered(1))
                      for op in operands]
        else:
            wspecs = [pl.BlockSpec(op.shape, lambda i: (0, 0))
                      for op in operands]
        in_specs = [pl.BlockSpec((block_n, in_pad), lambda i: (i, 0))] + wspecs
        out_specs = pl.BlockSpec((block_n, out_pad), lambda i: (i, 0))
        y = pl.pallas_call(
            kernel,
            out_shape=jax.ShapeDtypeStruct((n_pad, out_pad), out_dtype),
            grid=(steps,),
            in_specs=in_specs,
            out_specs=out_specs,
            compiler_params=pltpu.CompilerParams(
                dimension_semantics=("parallel",),
                vmem_limit_bytes=48 * 1024 * 1024),
        )(x_p, *operands)
        return jax.block_until_ready(y)

    try:
        y = run(True)
    except Exception:
        # Fallback for JAX versions without BlockSpec(pipeline_mode=...).
        y = run(False)

    return y[:n, :out_size].reshape((n,) + tuple(output_shape))


# ---------------------------------------------------------------------------
# Pure numpy reference (validates conv-as-GEMM lowering, BN fold, pruning, pad)
# ---------------------------------------------------------------------------
def _np_conv_transpose2d(x, w, stride, pad):
    n, cin, h_in, w_in = x.shape
    _, cout, kh, kw = w.shape
    h_out = (h_in - 1) * stride - 2 * pad + kh
    w_out = (w_in - 1) * stride - 2 * pad + kw
    out = np.zeros((n, cout, h_out, w_out), dtype=np.float64)
    for b in range(n):
        for ci in range(cin):
            for ih in range(h_in):
                for iw in range(w_in):
                    v = x[b, ci, ih, iw]
                    for r in range(kh):
                        oh = ih * stride - pad + r
                        if oh < 0 or oh >= h_out:
                            continue
                        for c in range(kw):
                            ow = iw * stride - pad + c
                            if ow < 0 or ow >= w_out:
                                continue
                            out[b, :, oh, ow] += v * w[ci, :, r, c]
    return out


def _np_forward(x, params, slope, output_shape, eps=1e-5):
    def lrelu(v):
        return np.where(v >= 0, v, slope * v)

    y = x.astype(np.float64)
    for name in ("l1", "l2", "l3", "l4"):
        p = params[name]
        y = _np_conv_transpose2d(y, p["weight"].astype(np.float64),
                                 p["stride"], p["pad"])
        scale = (p["gamma"] / np.sqrt(p["var"] + eps))[None, :, None, None]
        y = (y - p["mean"][None, :, None, None]) * scale \
            + p["beta"][None, :, None, None]
        y = lrelu(y)
    y = y.reshape(y.shape[0], -1)                 # (N, ch, 1, 1) -> (N, ch)
    y = lrelu(y @ params["fc1"]["weight"].T + params["fc1"]["bias"])
    y = lrelu(y @ params["fc2"]["weight"].T + params["fc2"]["bias"])
    y = np.tanh(y @ params["fc3"]["weight"].T + params["fc3"]["bias"])
    return y.reshape((x.shape[0],) + tuple(output_shape))


# ---------------------------------------------------------------------------
if __name__ == "__main__":
    in_size, ch = 8, 4
    output_shape = (1, 16, 16)
    slope = 0.2
    batch = 2
    output_size = int(np.prod(output_shape))

    rng = np.random.default_rng(0)
    params = init_params(rng, in_size, ch, output_size)

    # DCGAN-style latent input: (N, in_size, 1, 1)
    x = jax.random.normal(jax.random.PRNGKey(0), (batch, in_size, 1, 1),
                          dtype=jnp.float32)
    ref = _np_forward(np.asarray(x), params, slope, output_shape)

    # 1) f32 operands: validates the GEMM lowering, BN fold, dead-column
    #    pruning and padding against the f64 reference at tight tolerance
    #    (activation dtype stays f32 because the weights are f32).
    ops_f32, in_pad, out_pad = build_operands(params, weight_dtype=jnp.float32)
    out_f32 = generator_forward(x, ops_f32, slope, output_shape, in_pad, out_pad)
    out_f32 = jax.block_until_ready(out_f32)
    assert out_f32.shape == (batch,) + output_shape, out_f32.shape
    np.testing.assert_allclose(np.asarray(out_f32), ref, rtol=3e-4, atol=1e-5)

    # 2) bf16 weights (production path): bf16 elementwise on v6e/v7x, f32 on
    #    v5e; tolerance appropriate for bf16 weights + bf16 activations.
    ops_bf16, in_pad, out_pad = build_operands(params, weight_dtype=jnp.bfloat16)
    out = generator_forward(x, ops_bf16, slope, output_shape, in_pad, out_pad)
    out = jax.block_until_ready(out)
    assert out.shape == (batch,) + output_shape, out.shape
    np.testing.assert_allclose(np.asarray(out), ref, rtol=5e-2, atol=5e-2)

    print("KERNEL_OK")
</pallas_src>

<mosaic_0001>
module attributes {stable_mosaic.version = 11 : i64} {
  func.func @_generator_kernel(%arg0: i32, %arg1: memref<8x8xf32, #tpu.memory_space<vmem>>, %arg2: memref<8x512xf32, #tpu.memory_space<vmem>>, %arg3: memref<1x512xf32, #tpu.memory_space<vmem>>, %arg4: memref<512x256xf32, #tpu.memory_space<vmem>>, %arg5: memref<1x256xf32, #tpu.memory_space<vmem>>, %arg6: memref<256x128xf32, #tpu.memory_space<vmem>>, %arg7: memref<1x128xf32, #tpu.memory_space<vmem>>, %arg8: memref<128x128xf32, #tpu.memory_space<vmem>>, %arg9: memref<1x128xf32, #tpu.memory_space<vmem>>, %arg10: memref<128x128xf32, #tpu.memory_space<vmem>>, %arg11: memref<1x128xf32, #tpu.memory_space<vmem>>, %arg12: memref<128x128xf32, #tpu.memory_space<vmem>>, %arg13: memref<1x128xf32, #tpu.memory_space<vmem>>, %arg14: memref<128x256xf32, #tpu.memory_space<vmem>>, %arg15: memref<1x256xf32, #tpu.memory_space<vmem>>, %arg16: memref<8x256xf32, #tpu.memory_space<vmem>>) attributes {dimension_semantics = [#tpu.dimension_semantics<parallel>], iteration_bounds = array<i64: 1>, scalar_prefetch = 0 : i64, scratch_operands = 0 : i64, tpu.core_type = #tpu.core_type<tc>, window_params = [{transform_indices = @transform_0, window_bounds = array<i64: 8, 8>}, {pipeline_mode = #tpu.pipeline_mode<synchronous>, transform_indices = @transform_1, window_bounds = array<i64: 8, 512>}, {pipeline_mode = #tpu.pipeline_mode<synchronous>, transform_indices = @transform_2, window_bounds = array<i64: 1, 512>}, {pipeline_mode = #tpu.pipeline_mode<synchronous>, transform_indices = @transform_3, window_bounds = array<i64: 512, 256>}, {pipeline_mode = #tpu.pipeline_mode<synchronous>, transform_indices = @transform_4, window_bounds = array<i64: 1, 256>}, {pipeline_mode = #tpu.pipeline_mode<synchronous>, transform_indices = @transform_5, window_bounds = array<i64: 256, 128>}, {pipeline_mode = #tpu.pipeline_mode<synchronous>, transform_indices = @transform_6, window_bounds = array<i64: 1, 128>}, {pipeline_mode = #tpu.pipeline_mode<synchronous>, transform_indices = @transform_7, window_bounds = array<i64: 128, 128>}, {pipeline_mode = #tpu.pipeline_mode<synchronous>, transform_indices = @transform_8, window_bounds = array<i64: 1, 128>}, {pipeline_mode = #tpu.pipeline_mode<synchronous>, transform_indices = @transform_9, window_bounds = array<i64: 128, 128>}, {pipeline_mode = #tpu.pipeline_mode<synchronous>, transform_indices = @transform_10, window_bounds = array<i64: 1, 128>}, {pipeline_mode = #tpu.pipeline_mode<synchronous>, transform_indices = @transform_11, window_bounds = array<i64: 128, 128>}, {pipeline_mode = #tpu.pipeline_mode<synchronous>, transform_indices = @transform_12, window_bounds = array<i64: 1, 128>}, {pipeline_mode = #tpu.pipeline_mode<synchronous>, transform_indices = @transform_13, window_bounds = array<i64: 128, 256>}, {pipeline_mode = #tpu.pipeline_mode<synchronous>, transform_indices = @transform_14, window_bounds = array<i64: 1, 256>}, {transform_indices = @transform_15, window_bounds = array<i64: 8, 256>}]} {
    %c0 = arith.constant 0 : index
    %c0_0 = arith.constant 0 : index
    %0 = vector.load %arg1[%c0, %c0_0] : memref<8x8xf32, #tpu.memory_space<vmem>>, vector<8x8xf32>
    %c0_1 = arith.constant 0 : index
    %c0_2 = arith.constant 0 : index
    %1 = vector.load %arg2[%c0_1, %c0_2] : memref<8x512xf32, #tpu.memory_space<vmem>>, vector<8x512xf32>
    %cst = arith.constant dense<0.000000e+00> : vector<8x512xf32>
    %2 = tpu.matmul %0, %1, %cst {dimension_numbers = #tpu.dot_dimension_numbers<[1], [0], [0], [1], [0, 0, 1, 1], [], []>} : vector<8x8xf32>, vector<8x512xf32>, vector<8x512xf32> -> vector<8x512xf32>
    %c0_3 = arith.constant 0 : index
    %c0_4 = arith.constant 0 : index
    %3 = vector.load %arg3[%c0_3, %c0_4] : memref<1x512xf32, #tpu.memory_space<vmem>>, vector<1x512xf32>
    %4 = vector.broadcast %3 : vector<1x512xf32> to vector<8x512xf32>
    %5 = arith.addf %2, %4 : vector<8x512xf32>
    %cst_5 = arith.constant 2.000000e-01 : f32
    %6 = vector.broadcast %cst_5 : f32 to vector<8x512xf32>
    %7 = arith.mulf %5, %6 : vector<8x512xf32>
    %8 = arith.maximumf %5, %7 : vector<8x512xf32>
    %c0_6 = arith.constant 0 : index
    %c0_7 = arith.constant 0 : index
    %9 = vector.load %arg4[%c0_6, %c0_7] : memref<512x256xf32, #tpu.memory_space<vmem>>, vector<512x256xf32>
    %cst_8 = arith.constant dense<0.000000e+00> : vector<8x256xf32>
    %10 = tpu.matmul %8, %9, %cst_8 {dimension_numbers = #tpu.dot_dimension_numbers<[1], [0], [0], [1], [0, 0, 1, 1], [], []>} : vector<8x512xf32>, vector<512x256xf32>, vector<8x256xf32> -> vector<8x256xf32>
    %c0_9 = arith.constant 0 : index
    %c0_10 = arith.constant 0 : index
    %11 = vector.load %arg5[%c0_9, %c0_10] : memref<1x256xf32, #tpu.memory_space<vmem>>, vector<1x256xf32>
    %12 = vector.broadcast %11 : vector<1x256xf32> to vector<8x256xf32>
    %13 = arith.addf %10, %12 : vector<8x256xf32>
    %cst_11 = arith.constant 2.000000e-01 : f32
    %14 = vector.broadcast %cst_11 : f32 to vector<8x256xf32>
    %15 = arith.mulf %13, %14 : vector<8x256xf32>
    %16 = arith.maximumf %13, %15 : vector<8x256xf32>
    %c0_12 = arith.constant 0 : index
    %c0_13 = arith.constant 0 : index
    %17 = vector.load %arg6[%c0_12, %c0_13] : memref<256x128xf32, #tpu.memory_space<vmem>>, vector<256x128xf32>
    %cst_14 = arith.constant dense<0.000000e+00> : vector<8x128xf32>
    %18 = tpu.matmul %16, %17, %cst_14 {dimension_numbers = #tpu.dot_dimension_numbers<[1], [0], [0], [1], [0, 0, 1, 1], [], []>} : vector<8x256xf32>, vector<256x128xf32>, vector<8x128xf32> -> vector<8x128xf32>
    %c0_15 = arith.constant 0 : index
    %c0_16 = arith.constant 0 : index
    %19 = vector.load %arg7[%c0_15, %c0_16] : memref<1x128xf32, #tpu.memory_space<vmem>>, vector<1x128xf32>
    %20 = vector.broadcast %19 : vector<1x128xf32> to vector<8x128xf32>
    %21 = arith.addf %18, %20 : vector<8x128xf32>
    %cst_17 = arith.constant 2.000000e-01 : f32
    %22 = vector.broadcast %cst_17 : f32 to vector<8x128xf32>
    %23 = arith.mulf %21, %22 : vector<8x128xf32>
    %24 = arith.maximumf %21, %23 : vector<8x128xf32>
    %c0_18 = arith.constant 0 : index
    %c0_19 = arith.constant 0 : index
    %25 = vector.load %arg8[%c0_18, %c0_19] : memref<128x128xf32, #tpu.memory_space<vmem>>, vector<128x128xf32>
    %cst_20 = arith.constant dense<0.000000e+00> : vector<8x128xf32>
    %26 = tpu.matmul %24, %25, %cst_20 {dimension_numbers = #tpu.dot_dimension_numbers<[1], [0], [0], [1], [0, 0, 1, 1], [], []>} : vector<8x128xf32>, vector<128x128xf32>, vector<8x128xf32> -> vector<8x128xf32>
    %c0_21 = arith.constant 0 : index
    %c0_22 = arith.constant 0 : index
    %27 = vector.load %arg9[%c0_21, %c0_22] : memref<1x128xf32, #tpu.memory_space<vmem>>, vector<1x128xf32>
    %28 = vector.broadcast %27 : vector<1x128xf32> to vector<8x128xf32>
    %29 = arith.addf %26, %28 : vector<8x128xf32>
    %cst_23 = arith.constant 2.000000e-01 : f32
    %30 = vector.broadcast %cst_23 : f32 to vector<8x128xf32>
    %31 = arith.mulf %29, %30 : vector<8x128xf32>
    %32 = arith.maximumf %29, %31 : vector<8x128xf32>
    %c0_24 = arith.constant 0 : index
    %c0_25 = arith.constant 0 : index
    %33 = vector.load %arg10[%c0_24, %c0_25] : memref<128x128xf32, #tpu.memory_space<vmem>>, vector<128x128xf32>
    %cst_26 = arith.constant dense<0.000000e+00> : vector<8x128xf32>
    %34 = tpu.matmul %32, %33, %cst_26 {dimension_numbers = #tpu.dot_dimension_numbers<[1], [0], [0], [1], [0, 0, 1, 1], [], []>} : vector<8x128xf32>, vector<128x128xf32>, vector<8x128xf32> -> vector<8x128xf32>
    %c0_27 = arith.constant 0 : index
    %c0_28 = arith.constant 0 : index
    %35 = vector.load %arg11[%c0_27, %c0_28] : memref<1x128xf32, #tpu.memory_space<vmem>>, vector<1x128xf32>
    %36 = vector.broadcast %35 : vector<1x128xf32> to vector<8x128xf32>
    %37 = arith.addf %34, %36 : vector<8x128xf32>
    %cst_29 = arith.constant 2.000000e-01 : f32
    %38 = vector.broadcast %cst_29 : f32 to vector<8x128xf32>
    %39 = arith.mulf %37, %38 : vector<8x128xf32>
    %40 = arith.maximumf %37, %39 : vector<8x128xf32>
    %c0_30 = arith.constant 0 : index
    %c0_31 = arith.constant 0 : index
    %41 = vector.load %arg12[%c0_30, %c0_31] : memref<128x128xf32, #tpu.memory_space<vmem>>, vector<128x128xf32>
    %cst_32 = arith.constant dense<0.000000e+00> : vector<8x128xf32>
    %42 = tpu.matmul %40, %41, %cst_32 {dimension_numbers = #tpu.dot_dimension_numbers<[1], [0], [0], [1], [0, 0, 1, 1], [], []>} : vector<8x128xf32>, vector<128x128xf32>, vector<8x128xf32> -> vector<8x128xf32>
    %c0_33 = arith.constant 0 : index
    %c0_34 = arith.constant 0 : index
    %43 = vector.load %arg13[%c0_33, %c0_34] : memref<1x128xf32, #tpu.memory_space<vmem>>, vector<1x128xf32>
    %44 = vector.broadcast %43 : vector<1x128xf32> to vector<8x128xf32>
    %45 = arith.addf %42, %44 : vector<8x128xf32>
    %cst_35 = arith.constant 2.000000e-01 : f32
    %46 = vector.broadcast %cst_35 : f32 to vector<8x128xf32>
    %47 = arith.mulf %45, %46 : vector<8x128xf32>
    %48 = arith.maximumf %45, %47 : vector<8x128xf32>
    %c0_36 = arith.constant 0 : index
    %c0_37 = arith.constant 0 : index
    %49 = vector.load %arg14[%c0_36, %c0_37] : memref<128x256xf32, #tpu.memory_space<vmem>>, vector<128x256xf32>
    %cst_38 = arith.constant dense<0.000000e+00> : vector<8x256xf32>
    %50 = tpu.matmul %48, %49, %cst_38 {dimension_numbers = #tpu.dot_dimension_numbers<[1], [0], [0], [1], [0, 0, 1, 1], [], []>} : vector<8x128xf32>, vector<128x256xf32>, vector<8x256xf32> -> vector<8x256xf32>
    %c0_39 = arith.constant 0 : index
    %c0_40 = arith.constant 0 : index
    %51 = vector.load %arg15[%c0_39, %c0_40] : memref<1x256xf32, #tpu.memory_space<vmem>>, vector<1x256xf32>
    %52 = vector.broadcast %51 : vector<1x256xf32> to vector<8x256xf32>
    %53 = arith.addf %50, %52 : vector<8x256xf32>
    %54 = math.tanh %53 : vector<8x256xf32>
    %c0_41 = arith.constant 0 : index
    %c0_42 = arith.constant 0 : index
    %55 = vector.load %arg16[%c0_41, %c0_42] : memref<8x256xf32, #tpu.memory_space<vmem>>, vector<8x256xf32>
    tpu.vector_store %arg16[%c0_41, %c0_42], %54 {strides = array<i32>} : memref<8x256xf32, #tpu.memory_space<vmem>>, vector<8x256xf32>,
    return
  }
  func.func @transform_0(%arg0: i32) -> (i32, i32) {
    %c0_i32 = arith.constant 0 : i32
    %c0_i32_0 = arith.constant 0 : i32
    return %arg0, %c0_i32 : i32, i32
  }
  func.func @transform_1(%arg0: i32) -> (i32, i32) {
    %c0_i32 = arith.constant 0 : i32
    %c0_i32_0 = arith.constant 0 : i32
    %c0_i32_1 = arith.constant 0 : i32
    return %c0_i32, %c0_i32_0 : i32, i32
  }
  func.func @transform_2(%arg0: i32) -> (i32, i32) {
    %c0_i32 = arith.constant 0 : i32
    %c0_i32_0 = arith.constant 0 : i32
    %c0_i32_1 = arith.constant 0 : i32
    return %c0_i32, %c0_i32_0 : i32, i32
  }
  func.func @transform_3(%arg0: i32) -> (i32, i32) {
    %c0_i32 = arith.constant 0 : i32
    %c0_i32_0 = arith.constant 0 : i32
    %c0_i32_1 = arith.constant 0 : i32
    return %c0_i32, %c0_i32_0 : i32, i32
  }
  func.func @transform_4(%arg0: i32) -> (i32, i32) {
    %c0_i32 = arith.constant 0 : i32
    %c0_i32_0 = arith.constant 0 : i32
    %c0_i32_1 = arith.constant 0 : i32
    return %c0_i32, %c0_i32_0 : i32, i32
  }
  func.func @transform_5(%arg0: i32) -> (i32, i32) {
    %c0_i32 = arith.constant 0 : i32
    %c0_i32_0 = arith.constant 0 : i32
    %c0_i32_1 = arith.constant 0 : i32
    return %c0_i32, %c0_i32_0 : i32, i32
  }
  func.func @transform_6(%arg0: i32) -> (i32, i32) {
    %c0_i32 = arith.constant 0 : i32
    %c0_i32_0 = arith.constant 0 : i32
    %c0_i32_1 = arith.constant 0 : i32
    return %c0_i32, %c0_i32_0 : i32, i32
  }
  func.func @transform_7(%arg0: i32) -> (i32, i32) {
    %c0_i32 = arith.constant 0 : i32
    %c0_i32_0 = arith.constant 0 : i32
    %c0_i32_1 = arith.constant 0 : i32
    return %c0_i32, %c0_i32_0 : i32, i32
  }
  func.func @transform_8(%arg0: i32) -> (i32, i32) {
    %c0_i32 = arith.constant 0 : i32
    %c0_i32_0 = arith.constant 0 : i32
    %c0_i32_1 = arith.constant 0 : i32
    return %c0_i32, %c0_i32_0 : i32, i32
  }
  func.func @transform_9(%arg0: i32) -> (i32, i32) {
    %c0_i32 = arith.constant 0 : i32
    %c0_i32_0 = arith.constant 0 : i32
    %c0_i32_1 = arith.constant 0 : i32
    return %c0_i32, %c0_i32_0 : i32, i32
  }
  func.func @transform_10(%arg0: i32) -> (i32, i32) {
    %c0_i32 = arith.constant 0 : i32
    %c0_i32_0 = arith.constant 0 : i32
    %c0_i32_1 = arith.constant 0 : i32
    return %c0_i32, %c0_i32_0 : i32, i32
  }
  func.func @transform_11(%arg0: i32) -> (i32, i32) {
    %c0_i32 = arith.constant 0 : i32
    %c0_i32_0 = arith.constant 0 : i32
    %c0_i32_1 = arith.constant 0 : i32
    return %c0_i32, %c0_i32_0 : i32, i32
  }
  func.func @transform_12(%arg0: i32) -> (i32, i32) {
    %c0_i32 = arith.constant 0 : i32
    %c0_i32_0 = arith.constant 0 : i32
    %c0_i32_1 = arith.constant 0 : i32
    return %c0_i32, %c0_i32_0 : i32, i32
  }
  func.func @transform_13(%arg0: i32) -> (i32, i32) {
    %c0_i32 = arith.constant 0 : i32
    %c0_i32_0 = arith.constant 0 : i32
    %c0_i32_1 = arith.constant 0 : i32
    return %c0_i32, %c0_i32_0 : i32, i32
  }
  func.func @transform_14(%arg0: i32) -> (i32, i32) {
    %c0_i32 = arith.constant 0 : i32
    %c0_i32_0 = arith.constant 0 : i32
    %c0_i32_1 = arith.constant 0 : i32
    return %c0_i32, %c0_i32_0 : i32, i32
  }
  func.func @transform_15(%arg0: i32) -> (i32, i32) {
    %c0_i32 = arith.constant 0 : i32
    %c0_i32_0 = arith.constant 0 : i32
    return %arg0, %c0_i32 : i32, i32
  }
}

module attributes {stable_mosaic.version = 11 : i64} {
  func.func @_generator_kernel(%arg0: i32, %arg1: memref<8x8xf32, #tpu.memory_space<vmem>>, %arg2: memref<8x512xf32, #tpu.memory_space<vmem>>, %arg3: memref<1x512xf32, #tpu.memory_space<vmem>>, %arg4: memref<512x256xf32, #tpu.memory_space<vmem>>, %arg5: memref<1x256xf32, #tpu.memory_space<vmem>>, %arg6: memref<256x128xf32, #tpu.memory_space<vmem>>, %arg7: memref<1x128xf32, #tpu.memory_space<vmem>>, %arg8: memref<128x128xf32, #tpu.memory_space<vmem>>, %arg9: memref<1x128xf32, #tpu.memory_space<vmem>>, %arg10: memref<128x128xf32, #tpu.memory_space<vmem>>, %arg11: memref<1x128xf32, #tpu.memory_space<vmem>>, %arg12: memref<128x128xf32, #tpu.memory_space<vmem>>, %arg13: memref<1x128xf32, #tpu.memory_space<vmem>>, %arg14: memref<128x256xf32, #tpu.memory_space<vmem>>, %arg15: memref<1x256xf32, #tpu.memory_space<vmem>>, %arg16: memref<8x256xf32, #tpu.memory_space<vmem>>) attributes {dimension_semantics = [#tpu.dimension_semantics<parallel>], iteration_bounds = array<i64: 1>, scalar_prefetch = 0 : i64, scratch_operands = 0 : i64, tpu.core_type = #tpu.core_type<tc>, window_params = [{transform_indices = @transform_0, window_bounds = array<i64: 8, 8>}, {pipeline_mode = #tpu.pipeline_mode<synchronous>, transform_indices = @transform_1, window_bounds = array<i64: 8, 512>}, {pipeline_mode = #tpu.pipeline_mode<synchronous>, transform_indices = @transform_2, window_bounds = array<i64: 1, 512>}, {pipeline_mode = #tpu.pipeline_mode<synchronous>, transform_indices = @transform_3, window_bounds = array<i64: 512, 256>}, {pipeline_mode = #tpu.pipeline_mode<synchronous>, transform_indices = @transform_4, window_bounds = array<i64: 1, 256>}, {pipeline_mode = #tpu.pipeline_mode<synchronous>, transform_indices = @transform_5, window_bounds = array<i64: 256, 128>}, {pipeline_mode = #tpu.pipeline_mode<synchronous>, transform_indices = @transform_6, window_bounds = array<i64: 1, 128>}, {pipeline_mode = #tpu.pipeline_mode<synchronous>, transform_indices = @transform_7, window_bounds = array<i64: 128, 128>}, {pipeline_mode = #tpu.pipeline_mode<synchronous>, transform_indices = @transform_8, window_bounds = array<i64: 1, 128>}, {pipeline_mode = #tpu.pipeline_mode<synchronous>, transform_indices = @transform_9, window_bounds = array<i64: 128, 128>}, {pipeline_mode = #tpu.pipeline_mode<synchronous>, transform_indices = @transform_10, window_bounds = array<i64: 1, 128>}, {pipeline_mode = #tpu.pipeline_mode<synchronous>, transform_indices = @transform_11, window_bounds = array<i64: 128, 128>}, {pipeline_mode = #tpu.pipeline_mode<synchronous>, transform_indices = @transform_12, window_bounds = array<i64: 1, 128>}, {pipeline_mode = #tpu.pipeline_mode<synchronous>, transform_indices = @transform_13, window_bounds = array<i64: 128, 256>}, {pipeline_mode = #tpu.pipeline_mode<synchronous>, transform_indices = @transform_14, window_bounds = array<i64: 1, 256>}, {transform_indices = @transform_15, window_bounds = array<i64: 8, 256>}]} {
    %c0 = arith.constant 0 : index
    %c0_0 = arith.constant 0 : index
    %0 = vector.load %arg1[%c0, %c0_0] : memref<8x8xf32, #tpu.memory_space<vmem>>, vector<8x8xf32>
    %c0_1 = arith.constant 0 : index
    %c0_2 = arith.constant 0 : index
    %1 = vector.load %arg2[%c0_1, %c0_2] : memref<8x512xf32, #tpu.memory_space<vmem>>, vector<8x512xf32>
    %cst = arith.constant dense<0.000000e+00> : vector<8x512xf32>
    %2 = tpu.matmul %0, %1, %cst {dimension_numbers = #tpu.dot_dimension_numbers<[1], [0], [0], [1], [0, 0, 1, 1], [], []>} : vector<8x8xf32>, vector<8x512xf32>, vector<8x512xf32> -> vector<8x512xf32>
    %c0_3 = arith.constant 0 : index
    %c0_4 = arith.constant 0 : index
    %3 = vector.load %arg3[%c0_3, %c0_4] : memref<1x512xf32, #tpu.memory_space<vmem>>, vector<1x512xf32>
    %4 = vector.broadcast %3 : vector<1x512xf32> to vector<8x512xf32>
    %5 = arith.addf %2, %4 : vector<8x512xf32>
    %cst_5 = arith.constant 2.000000e-01 : f32
    %6 = vector.broadcast %cst_5 : f32 to vector<8x512xf32>
    %7 = arith.mulf %5, %6 : vector<8x512xf32>
    %8 = arith.maximumf %5, %7 : vector<8x512xf32>
    %c0_6 = arith.constant 0 : index
    %c0_7 = arith.constant 0 : index
    %9 = vector.load %arg4[%c0_6, %c0_7] : memref<512x256xf32, #tpu.memory_space<vmem>>, vector<512x256xf32>
    %cst_8 = arith.constant dense<0.000000e+00> : vector<8x256xf32>
    %10 = tpu.matmul %8, %9, %cst_8 {dimension_numbers = #tpu.dot_dimension_numbers<[1], [0], [0], [1], [0, 0, 1, 1], [], []>} : vector<8x512xf32>, vector<512x256xf32>, vector<8x256xf32> -> vector<8x256xf32>
    %c0_9 = arith.constant 0 : index
    %c0_10 = arith.constant 0 : index
    %11 = vector.load %arg5[%c0_9, %c0_10] : memref<1x256xf32, #tpu.memory_space<vmem>>, vector<1x256xf32>
    %12 = vector.broadcast %11 : vector<1x256xf32> to vector<8x256xf32>
    %13 = arith.addf %10, %12 : vector<8x256xf32>
    %cst_11 = arith.constant 2.000000e-01 : f32
    %14 = vector.broadcast %cst_11 : f32 to vector<8x256xf32>
    %15 = arith.mulf %13, %14 : vector<8x256xf32>
    %16 = arith.maximumf %13, %15 : vector<8x256xf32>
    %c0_12 = arith.constant 0 : index
    %c0_13 = arith.constant 0 : index
    %17 = vector.load %arg6[%c0_12, %c0_13] : memref<256x128xf32, #tpu.memory_space<vmem>>, vector<256x128xf32>
    %cst_14 = arith.constant dense<0.000000e+00> : vector<8x128xf32>
    %18 = tpu.matmul %16, %17, %cst_14 {dimension_numbers = #tpu.dot_dimension_numbers<[1], [0], [0], [1], [0, 0, 1, 1], [], []>} : vector<8x256xf32>, vector<256x128xf32>, vector<8x128xf32> -> vector<8x128xf32>
    %c0_15 = arith.constant 0 : index
    %c0_16 = arith.constant 0 : index
    %19 = vector.load %arg7[%c0_15, %c0_16] : memref<1x128xf32, #tpu.memory_space<vmem>>, vector<1x128xf32>
    %20 = vector.broadcast %19 : vector<1x128xf32> to vector<8x128xf32>
    %21 = arith.addf %18, %20 : vector<8x128xf32>
    %cst_17 = arith.constant 2.000000e-01 : f32
    %22 = vector.broadcast %cst_17 : f32 to vector<8x128xf32>
    %23 = arith.mulf %21, %22 : vector<8x128xf32>
    %24 = arith.maximumf %21, %23 : vector<8x128xf32>
    %c0_18 = arith.constant 0 : index
    %c0_19 = arith.constant 0 : index
    %25 = vector.load %arg8[%c0_18, %c0_19] : memref<128x128xf32, #tpu.memory_space<vmem>>, vector<128x128xf32>
    %cst_20 = arith.constant dense<0.000000e+00> : vector<8x128xf32>
    %26 = tpu.matmul %24, %25, %cst_20 {dimension_numbers = #tpu.dot_dimension_numbers<[1], [0], [0], [1], [0, 0, 1, 1], [], []>} : vector<8x128xf32>, vector<128x128xf32>, vector<8x128xf32> -> vector<8x128xf32>
    %c0_21 = arith.constant 0 : index
    %c0_22 = arith.constant 0 : index
    %27 = vector.load %arg9[%c0_21, %c0_22] : memref<1x128xf32, #tpu.memory_space<vmem>>, vector<1x128xf32>
    %28 = vector.broadcast %27 : vector<1x128xf32> to vector<8x128xf32>
    %29 = arith.addf %26, %28 : vector<8x128xf32>
    %cst_23 = arith.constant 2.000000e-01 : f32
    %30 = vector.broadcast %cst_23 : f32 to vector<8x128xf32>
    %31 = arith.mulf %29, %30 : vector<8x128xf32>
    %32 = arith.maximumf %29, %31 : vector<8x128xf32>
    %c0_24 = arith.constant 0 : index
    %c0_25 = arith.constant 0 : index
    %33 = vector.load %arg10[%c0_24, %c0_25] : memref<128x128xf32, #tpu.memory_space<vmem>>, vector<128x128xf32>
    %cst_26 = arith.constant dense<0.000000e+00> : vector<8x128xf32>
    %34 = tpu.matmul %32, %33, %cst_26 {dimension_numbers = #tpu.dot_dimension_numbers<[1], [0], [0], [1], [0, 0, 1, 1], [], []>} : vector<8x128xf32>, vector<128x128xf32>, vector<8x128xf32> -> vector<8x128xf32>
    %c0_27 = arith.constant 0 : index
    %c0_28 = arith.constant 0 : index
    %35 = vector.load %arg11[%c0_27, %c0_28] : memref<1x128xf32, #tpu.memory_space<vmem>>, vector<1x128xf32>
    %36 = vector.broadcast %35 : vector<1x128xf32> to vector<8x128xf32>
    %37 = arith.addf %34, %36 : vector<8x128xf32>
    %cst_29 = arith.constant 2.000000e-01 : f32
    %38 = vector.broadcast %cst_29 : f32 to vector<8x128xf32>
    %39 = arith.mulf %37, %38 : vector<8x128xf32>
    %40 = arith.maximumf %37, %39 : vector<8x128xf32>
    %c0_30 = arith.constant 0 : index
    %c0_31 = arith.constant 0 : index
    %41 = vector.load %arg12[%c0_30, %c0_31] : memref<128x128xf32, #tpu.memory_space<vmem>>, vector<128x128xf32>
    %cst_32 = arith.constant dense<0.000000e+00> : vector<8x128xf32>
    %42 = tpu.matmul %40, %41, %cst_32 {dimension_numbers = #tpu.dot_dimension_numbers<[1], [0], [0], [1], [0, 0, 1, 1], [], []>} : vector<8x128xf32>, vector<128x128xf32>, vector<8x128xf32> -> vector<8x128xf32>
    %c0_33 = arith.constant 0 : index
    %c0_34 = arith.constant 0 : index
    %43 = vector.load %arg13[%c0_33, %c0_34] : memref<1x128xf32, #tpu.memory_space<vmem>>, vector<1x128xf32>
    %44 = vector.broadcast %43 : vector<1x128xf32> to vector<8x128xf32>
    %45 = arith.addf %42, %44 : vector<8x128xf32>
    %cst_35 = arith.constant 2.000000e-01 : f32
    %46 = vector.broadcast %cst_35 : f32 to vector<8x128xf32>
    %47 = arith.mulf %45, %46 : vector<8x128xf32>
    %48 = arith.maximumf %45, %47 : vector<8x128xf32>
    %c0_36 = arith.constant 0 : index
    %c0_37 = arith.constant 0 : index
    %49 = vector.load %arg14[%c0_36, %c0_37] : memref<128x256xf32, #tpu.memory_space<vmem>>, vector<128x256xf32>
    %cst_38 = arith.constant dense<0.000000e+00> : vector<8x256xf32>
    %50 = tpu.matmul %48, %49, %cst_38 {dimension_numbers = #tpu.dot_dimension_numbers<[1], [0], [0], [1], [0, 0, 1, 1], [], []>} : vector<8x128xf32>, vector<128x256xf32>, vector<8x256xf32> -> vector<8x256xf32>
    %c0_39 = arith.constant 0 : index
    %c0_40 = arith.constant 0 : index
    %51 = vector.load %arg15[%c0_39, %c0_40] : memref<1x256xf32, #tpu.memory_space<vmem>>, vector<1x256xf32>
    %52 = vector.broadcast %51 : vector<1x256xf32> to vector<8x256xf32>
    %53 = arith.addf %50, %52 : vector<8x256xf32>
    %54 = math.tanh %53 : vector<8x256xf32>
    %c0_41 = arith.constant 0 : index
    %c0_42 = arith.constant 0 : index
    %55 = vector.load %arg16[%c0_41, %c0_42] : memref<8x256xf32, #tpu.memory_space<vmem>>, vector<8x256xf32>
    tpu.vector_store %arg16[%c0_41, %c0_42], %54 {strides = array<i32>} : memref<8x256xf32, #tpu.memory_space<vmem>>, vector<8x256xf32>,
    return
  }
  func.func @transform_0(%arg0: i32) -> (i32, i32) {
    %c0_i32 = arith.constant 0 : i32
    %c0_i32_0 = arith.constant 0 : i32
    return %arg0, %c0_i32 : i32, i32
  }
  func.func @transform_1(%arg0: i32) -> (i32, i32) {
    %c0_i32 = arith.constant 0 : i32
    %c0_i32_0 = arith.constant 0 : i32
    %c0_i32_1 = arith.constant 0 : i32
    return %c0_i32, %c0_i32_0 : i32, i32
  }
  func.func @transform_2(%arg0: i32) -> (i32, i32) {
    %c0_i32 = arith.constant 0 : i32
    %c0_i32_0 = arith.constant 0 : i32
    %c0_i32_1 = arith.constant 0 : i32
    return %c0_i32, %c0_i32_0 : i32, i32
  }
  func.func @transform_3(%arg0: i32) -> (i32, i32) {
    %c0_i32 = arith.constant 0 : i32
    %c0_i32_0 = arith.constant 0 : i32
    %c0_i32_1 = arith.constant 0 : i32
    return %c0_i32, %c0_i32_0 : i32, i32
  }
  func.func @transform_4(%arg0: i32) -> (i32, i32) {
    %c0_i32 = arith.constant 0 : i32
    %c0_i32_0 = arith.constant 0 : i32
    %c0_i32_1 = arith.constant 0 : i32
    return %c0_i32, %c0_i32_0 : i32, i32
  }
  func.func @transform_5(%arg0: i32) -> (i32, i32) {
    %c0_i32 = arith.constant 0 : i32
    %c0_i32_0 = arith.constant 0 : i32
    %c0_i32_1 = arith.constant 0 : i32
    return %c0_i32, %c0_i32_0 : i32, i32
  }
  func.func @transform_6(%arg0: i32) -> (i32, i32) {
    %c0_i32 = arith.constant 0 : i32
    %c0_i32_0 = arith.constant 0 : i32
    %c0_i32_1 = arith.constant 0 : i32
    return %c0_i32, %c0_i32_0 : i32, i32
  }
  func.func @transform_7(%arg0: i32) -> (i32, i32) {
    %c0_i32 = arith.constant 0 : i32
    %c0_i32_0 = arith.constant 0 : i32
    %c0_i32_1 = arith.constant 0 : i32
    return %c0_i32, %c0_i32_0 : i32, i32
  }
  func.func @transform_8(%arg0: i32) -> (i32, i32) {
    %c0_i32 = arith.constant 0 : i32
    %c0_i32_0 = arith.constant 0 : i32
    %c0_i32_1 = arith.constant 0 : i32
    return %c0_i32, %c0_i32_0 : i32, i32
  }
  func.func @transform_9(%arg0: i32) -> (i32, i32) {
    %c0_i32 = arith.constant 0 : i32
    %c0_i32_0 = arith.constant 0 : i32
    %c0_i32_1 = arith.constant 0 : i32
    return %c0_i32, %c0_i32_0 : i32, i32
  }
  func.func @transform_10(%arg0: i32) -> (i32, i32) {
    %c0_i32 = arith.constant 0 : i32
    %c0_i32_0 = arith.constant 0 : i32
    %c0_i32_1 = arith.constant 0 : i32
    return %c0_i32, %c0_i32_0 : i32, i32
  }
  func.func @transform_11(%arg0: i32) -> (i32, i32) {
    %c0_i32 = arith.constant 0 : i32
    %c0_i32_0 = arith.constant 0 : i32
    %c0_i32_1 = arith.constant 0 : i32
    return %c0_i32, %c0_i32_0 : i32, i32
  }
  func.func @transform_12(%arg0: i32) -> (i32, i32) {
    %c0_i32 = arith.constant 0 : i32
    %c0_i32_0 = arith.constant 0 : i32
    %c0_i32_1 = arith.constant 0 : i32
    return %c0_i32, %c0_i32_0 : i32, i32
  }
  func.func @transform_13(%arg0: i32) -> (i32, i32) {
    %c0_i32 = arith.constant 0 : i32
    %c0_i32_0 = arith.constant 0 : i32
    %c0_i32_1 = arith.constant 0 : i32
    return %c0_i32, %c0_i32_0 : i32, i32
  }
  func.func @transform_14(%arg0: i32) -> (i32, i32) {
    %c0_i32 = arith.constant 0 : i32
    %c0_i32_0 = arith.constant 0 : i32
    %c0_i32_1 = arith.constant 0 : i32
    return %c0_i32, %c0_i32_0 : i32, i32
  }
  func.func @transform_15(%arg0: i32) -> (i32, i32) {
    %c0_i32 = arith.constant 0 : i32
    %c0_i32_0 = arith.constant 0 : i32
    return %arg0, %c0_i32 : i32, i32
  }
}

</mosaic_0001>

<llo_original>
// kernel: tpu_custom_call.1
$region0: #{tpu_custom_call.1}
  #allocation0 [shape = 'u32[]', space=smem, size = 0x4, offset = 0x4, fixed_abs, tag = 'smem constant byte address 0x4 - core index']
  #allocation1 [shape = 'u32[72,128]{1,0:T(1,128)}', space=vmem, size = 0x9000, scoped, tag = 'internal scratch']
  %s0 = inlined_call_operand.hbm [shape: f32[8,8], index: 0, kind: input, shape index: {}]
  %s1 = inlined_call_operand.hbm [shape: f32[8,512], index: 1, kind: input, shape index: {}]
  %s2 = inlined_call_operand.hbm [shape: f32[1,512], index: 2, kind: input, shape index: {}]
  %s3 = inlined_call_operand.hbm [shape: f32[512,256], index: 3, kind: input, shape index: {}]
  %s4 = inlined_call_operand.vmem [shape: f32[1,256], index: 4, kind: input, shape index: {}]
  %s5 = inlined_call_operand.hbm [shape: f32[256,128], index: 5, kind: input, shape index: {}]
  %s6 = inlined_call_operand.vmem [shape: f32[1,128], index: 6, kind: input, shape index: {}]
  %s7 = inlined_call_operand.hbm [shape: f32[128,128], index: 7, kind: input, shape index: {}]
  %s8 = inlined_call_operand.vmem [shape: f32[1,128], index: 8, kind: input, shape index: {}]
  %s9 = inlined_call_operand.hbm [shape: f32[128,128], index: 9, kind: input, shape index: {}]
  %s10 = inlined_call_operand.vmem [shape: f32[1,128], index: 10, kind: input, shape index: {}]
  %s11 = inlined_call_operand.hbm [shape: f32[128,128], index: 11, kind: input, shape index: {}]
  %s12 = inlined_call_operand.vmem [shape: f32[1,128], index: 12, kind: input, shape index: {}]
  %s13 = inlined_call_operand.hbm [shape: f32[128,256], index: 13, kind: input, shape index: {}]
  %s14 = inlined_call_operand.vmem [shape: f32[1,256], index: 14, kind: input, shape index: {}]
  %s15 = inlined_call_operand.hbm [shape: f32[8,256], index: 15, kind: output, shape index: {}]
  %s16 = sld [smem:[#allocation0]]
  $region106: #{tpu_custom_call.1} parent=0
    _
  %s18 = ssub.s32 1, %s16
  %s19 = scalar_select 0, %s18, %s16
  $region1: #{tpu_custom_call.1} parent=0
    #allocation2 [shape = 'u8[4096]{0}', space=vmem, size = 0x1000, scoped, tag = 'input window, operand 0, single buffered']
    #allocation3 [shape = 's32[1]{0}', space=sflag, size = 0x4, scoped, tag = 'scoped memory for tpu_custom_call.1']
    #allocation4 [shape = 's32[1]{0}', space=sflag, size = 0x4, scoped, tag = 'scoped memory for tpu_custom_call.1']
    #allocation5 [shape = 'u8[16384]{0}', space=vmem, size = 0x4000, scoped, tag = 'input window, operand 1, single buffered']
    #allocation6 [shape = 's32[1]{0}', space=sflag, size = 0x4, scoped, tag = 'scoped memory for tpu_custom_call.1']
    #allocation7 [shape = 'u8[2048]{0}', space=vmem, size = 0x800, scoped, tag = 'input window, operand 2, single buffered']
    #allocation8 [shape = 'u8[524288]{0}', space=vmem, size = 0x80000, scoped, tag = 'input window, operand 3, single buffered']
    #allocation9 [shape = 's32[1]{0}', space=sflag, size = 0x4, scoped, tag = 'scoped memory for tpu_custom_call.1']
    #allocation10 [shape = 'u8[131072]{0}', space=vmem, size = 0x20000, scoped, tag = 'input window, operand 5, single buffered']
    #allocation11 [shape = 'u8[65536]{0}', space=vmem, size = 0x10000, scoped, tag = 'input window, operand 7, single buffered']
    #allocation12 [shape = 's32[1]{0}', space=sflag, size = 0x4, scoped, tag = 'scoped memory for tpu_custom_call.1']
    #allocation13 [shape = 'u8[65536]{0}', space=vmem, size = 0x10000, scoped, tag = 'input window, operand 9, single buffered']
    #allocation14 [shape = 'u8[65536]{0}', space=vmem, size = 0x10000, scoped, tag = 'input window, operand 11, single buffered']
    #allocation15 [shape = 's32[1]{0}', space=sflag, size = 0x4, scoped, tag = 'scoped memory for tpu_custom_call.1']
    #allocation16 [shape = 'u8[131072]{0}', space=vmem, size = 0x20000, scoped, tag = 'input window, operand 13, single buffered']
    #allocation17 [shape = 'u8[8192]{0}', space=vmem, size = 0x2000, scoped, tag = 'output window, operand 0, single buffered']
    %20 = vsyncpa [#allocation3], 0
    %21 = vsyncpa [#allocation6], 0
    %22 = vsyncpa [#allocation9], 0
    %23 = vsyncpa [#allocation12], 0
    %24 = vsyncpa [#allocation15], 0
    %25 = vsyncpa [#allocation4], 0
    // Predicated region
    $region2: #{tpu_custom_call.1} parent=1 // pred_check
      _
    $region3: #{tpu_custom_call.1} parent=1 // pred_check_branch
      %27 = sbr.rel (0) target = $region5
    $region4: #{tpu_custom_call.1} parent=1 // pred_region
      %29 = vsyncadd [#allocation3], 0
      %s31 = sshll.u32 %s0, 4
      %s32 = int_to_ptr.hbm [resolvable:$true] %s31
      %s33 = sshll.u32 [#allocation2], 4
      %s34 = int_to_ptr.vmem [resolvable:$true] %s33
      %36 = dma.hbm_to_vmem [thread:$0]  %s32, 128, %s34, [#allocation3]
    $region5: #{tpu_custom_call.1} parent=1 // pred_fallthru
      _
    // Predicated region
    $region6: #{tpu_custom_call.1} parent=1 // pred_check
      _
    $region7: #{tpu_custom_call.1} parent=1 // pred_check_branch
      %38 = sbr.rel (0) target = $region9
    $region8: #{tpu_custom_call.1} parent=1 // pred_region
      %40 = vsyncadd [#allocation6], 0
      %s42 = sshll.u32 %s1, 4
      %s43 = int_to_ptr.hbm [resolvable:$true] %s42
      %s44 = sshll.u32 [#allocation5], 4
      %s45 = int_to_ptr.vmem [resolvable:$true] %s44
      %47 = dma.hbm_to_vmem [thread:$0]  %s43, 512, %s45, [#allocation6]
    $region9: #{tpu_custom_call.1} parent=1 // pred_fallthru
      _
    // Predicated region
    $region10: #{tpu_custom_call.1} parent=1 // pred_check
      _
    $region11: #{tpu_custom_call.1} parent=1 // pred_check_branch
      %49 = sbr.rel (0) target = $region13
    $region12: #{tpu_custom_call.1} parent=1 // pred_region
      %51 = vsyncadd [#allocation6], 0
      %s53 = sshll.u32 %s2, 4
      %s54 = int_to_ptr.hbm [resolvable:$true] %s53
      %s55 = sshll.u32 [#allocation7], 4
      %s56 = int_to_ptr.vmem [resolvable:$true] %s55
      %58 = dma.hbm_to_vmem [thread:$0]  %s54, 64, %s56, [#allocation6]
    $region13: #{tpu_custom_call.1} parent=1 // pred_fallthru
      _
    // Predicated region
    $region14: #{tpu_custom_call.1} parent=1 // pred_check
      _
    $region15: #{tpu_custom_call.1} parent=1 // pred_check_branch
      %60 = sbr.rel (0) target = $region17
    $region16: #{tpu_custom_call.1} parent=1 // pred_region
      %62 = vsyncadd [#allocation9], 0
      %s63 = sshll.u32 %s3, 4
      %s64 = int_to_ptr.hbm [resolvable:$true] %s63
      %s65 = sshll.u32 [#allocation8], 4
      %s66 = int_to_ptr.vmem [resolvable:$true] %s65
      %71 = dma.hbm_to_vmem [thread:$0]  %s64, 16384, %s66, [#allocation9], 256, 256, 16
    $region17: #{tpu_custom_call.1} parent=1 // pred_fallthru
      _
    // Predicated region
    $region18: #{tpu_custom_call.1} parent=1 // pred_check
      _
    $region19: #{tpu_custom_call.1} parent=1 // pred_check_branch
      %73 = sbr.rel (0) target = $region21
    $region20: #{tpu_custom_call.1} parent=1 // pred_region
      _
    $region21: #{tpu_custom_call.1} parent=1 // pred_fallthru
      _
    // Predicated region
    $region22: #{tpu_custom_call.1} parent=1 // pred_check
      _
    $region23: #{tpu_custom_call.1} parent=1 // pred_check_branch
      %75 = sbr.rel (0) target = $region25
    $region24: #{tpu_custom_call.1} parent=1 // pred_region
      %77 = vsyncadd [#allocation9], 0
      %s78 = sshll.u32 %s5, 4
      %s79 = int_to_ptr.hbm [resolvable:$true] %s78
      %s80 = sshll.u32 [#allocation10], 4
      %s81 = int_to_ptr.vmem [resolvable:$true] %s80
      %86 = dma.hbm_to_vmem [thread:$0]  %s79, 4096, %s81, [#allocation9], 128, 128, 8
    $region25: #{tpu_custom_call.1} parent=1 // pred_fallthru
      _
    // Predicated region
    $region26: #{tpu_custom_call.1} parent=1 // pred_check
      _
    $region27: #{tpu_custom_call.1} parent=1 // pred_check_branch
      %88 = sbr.rel (0) target = $region29
    $region28: #{tpu_custom_call.1} parent=1 // pred_region
      _
    $region29: #{tpu_custom_call.1} parent=1 // pred_fallthru
      _
    // Predicated region
    $region30: #{tpu_custom_call.1} parent=1 // pred_check
      _
    $region31: #{tpu_custom_call.1} parent=1 // pred_check_branch
      %90 = sbr.rel (0) target = $region33
    $region32: #{tpu_custom_call.1} parent=1 // pred_region
      %92 = vsyncadd [#allocation12], 0
      %s93 = sshll.u32 %s7, 4
      %s94 = int_to_ptr.hbm [resolvable:$true] %s93
      %s95 = sshll.u32 [#allocation11], 4
      %s96 = int_to_ptr.vmem [resolvable:$true] %s95
      %101 = dma.hbm_to_vmem [thread:$0]  %s94, 2048, %s96, [#allocation12], 128, 128, 8
    $region33: #{tpu_custom_call.1} parent=1 // pred_fallthru
      _
    // Predicated region
    $region34: #{tpu_custom_call.1} parent=1 // pred_check
      _
    $region35: #{tpu_custom_call.1} parent=1 // pred_check_branch
      %103 = sbr.rel (0) target = $region37
    $region36: #{tpu_custom_call.1} parent=1 // pred_region
      _
    $region37: #{tpu_custom_call.1} parent=1 // pred_fallthru
      _
    // Predicated region
    $region38: #{tpu_custom_call.1} parent=1 // pred_check
      _
    $region39: #{tpu_custom_call.1} parent=1 // pred_check_branch
      %105 = sbr.rel (0) target = $region41
    $region40: #{tpu_custom_call.1} parent=1 // pred_region
      %107 = vsyncadd [#allocation12], 0
      %s108 = sshll.u32 %s9, 4
      %s109 = int_to_ptr.hbm [resolvable:$true] %s108
      %s110 = sshll.u32 [#allocation13], 4
      %s111 = int_to_ptr.vmem [resolvable:$true] %s110
      %116 = dma.hbm_to_vmem [thread:$0]  %s109, 2048, %s111, [#allocation12], 128, 128, 8
    $region41: #{tpu_custom_call.1} parent=1 // pred_fallthru
      _
    // Predicated region
    $region42: #{tpu_custom_call.1} parent=1 // pred_check
      _
    $region43: #{tpu_custom_call.1} parent=1 // pred_check_branch
      %118 = sbr.rel (0) target = $region45
    $region44: #{tpu_custom_call.1} parent=1 // pred_region
      _
    $region45: #{tpu_custom_call.1} parent=1 // pred_fallthru
      _
    // Predicated region
    $region46: #{tpu_custom_call.1} parent=1 // pred_check
      _
    $region47: #{tpu_custom_call.1} parent=1 // pred_check_branch
      %120 = sbr.rel (0) target = $region49
    $region48: #{tpu_custom_call.1} parent=1 // pred_region
      %122 = vsyncadd [#allocation15], 0
      %s123 = sshll.u32 %s11, 4
      %s124 = int_to_ptr.hbm [resolvable:$true] %s123
      %s125 = sshll.u32 [#allocation14], 4
      %s126 = int_to_ptr.vmem [resolvable:$true] %s125
      %131 = dma.hbm_to_vmem [thread:$0]  %s124, 2048, %s126, [#allocation15], 128, 128, 8
    $region49: #{tpu_custom_call.1} parent=1 // pred_fallthru
      _
    // Predicated region
    $region50: #{tpu_custom_call.1} parent=1 // pred_check
      _
    $region51: #{tpu_custom_call.1} parent=1 // pred_check_branch
      %133 = sbr.rel (0) target = $region53
    $region52: #{tpu_custom_call.1} parent=1 // pred_region
      _
    $region53: #{tpu_custom_call.1} parent=1 // pred_fallthru
      _
    // Predicated region
    $region54: #{tpu_custom_call.1} parent=1 // pred_check
      _
    $region55: #{tpu_custom_call.1} parent=1 // pred_check_branch
      %135 = sbr.rel (0) target = $region57
    $region56: #{tpu_custom_call.1} parent=1 // pred_region
      %137 = vsyncadd [#allocation15], 0
      %s138 = sshll.u32 %s13, 4
      %s139 = int_to_ptr.hbm [resolvable:$true] %s138
      %s140 = sshll.u32 [#allocation16], 4
      %s141 = int_to_ptr.vmem [resolvable:$true] %s140
      %146 = dma.hbm_to_vmem [thread:$0]  %s139, 4096, %s141, [#allocation15], 256, 256, 16
    $region57: #{tpu_custom_call.1} parent=1 // pred_fallthru
      _
    // Predicated region
    $region58: #{tpu_custom_call.1} parent=1 // pred_check
      _
    $region59: #{tpu_custom_call.1} parent=1 // pred_check_branch
      %148 = sbr.rel (0) target = $region61
    $region60: #{tpu_custom_call.1} parent=1 // pred_region
      _
    $region61: #{tpu_custom_call.1} parent=1 // pred_fallthru
      _
    // Predicated region
    $region62: #{tpu_custom_call.1} parent=1 // pred_check
      _
    $region63: #{tpu_custom_call.1} parent=1 // pred_check_branch
      %150 = sbr.rel (0) target = $region65
    $region64: #{tpu_custom_call.1} parent=1 // pred_region
      %152 = dma.done [#allocation3], 128
    $region65: #{tpu_custom_call.1} parent=1 // pred_fallthru
      _
    // Predicated region
    $region66: #{tpu_custom_call.1} parent=1 // pred_check
      _
    $region67: #{tpu_custom_call.1} parent=1 // pred_check_branch
      %154 = sbr.rel (0) target = $region69
    $region68: #{tpu_custom_call.1} parent=1 // pred_region
      %156 = dma.done [#allocation6], 512
    $region69: #{tpu_custom_call.1} parent=1 // pred_fallthru
      _
    // Predicated region
    $region70: #{tpu_custom_call.1} parent=1 // pred_check
      _
    $region71: #{tpu_custom_call.1} parent=1 // pred_check_branch
      %158 = sbr.rel (0) target = $region73
    $region72: #{tpu_custom_call.1} parent=1 // pred_region
      %160 = dma.done [#allocation6], 64
    $region73: #{tpu_custom_call.1} parent=1 // pred_fallthru
      _
    // Predicated region
    $region74: #{tpu_custom_call.1} parent=1 // pred_check
      _
    $region75: #{tpu_custom_call.1} parent=1 // pred_check_branch
      %162 = sbr.rel (0) target = $region77
    $region76: #{tpu_custom_call.1} parent=1 // pred_region
      %164 = dma.done [#allocation9], 16384
    $region77: #{tpu_custom_call.1} parent=1 // pred_fallthru
      _
    // Predicated region
    $region78: #{tpu_custom_call.1} parent=1 // pred_check
      _
    $region79: #{tpu_custom_call.1} parent=1 // pred_check_branch
      %166 = sbr.rel (0) target = $region81
    $region80: #{tpu_custom_call.1} parent=1 // pred_region
      %168 = dma.done [#allocation9], 4096
    $region81: #{tpu_custom_call.1} parent=1 // pred_fallthru
      _
    // Predicated region
    $region82: #{tpu_custom_call.1} parent=1 // pred_check
      _
    $region83: #{tpu_custom_call.1} parent=1 // pred_check_branch
      %170 = sbr.rel (0) target = $region85
    $region84: #{tpu_custom_call.1} parent=1 // pred_region
      %172 = dma.done [#allocation12], 2048
    $region85: #{tpu_custom_call.1} parent=1 // pred_fallthru
      _
    // Predicated region
    $region86: #{tpu_custom_call.1} parent=1 // pred_check
      _
    $region87: #{tpu_custom_call.1} parent=1 // pred_check_branch
      %174 = sbr.rel (0) target = $region89
    $region88: #{tpu_custom_call.1} parent=1 // pred_region
      %176 = dma.done [#allocation12], 2048
    $region89: #{tpu_custom_call.1} parent=1 // pred_fallthru
      _
    // Predicated region
    $region90: #{tpu_custom_call.1} parent=1 // pred_check
      _
    $region91: #{tpu_custom_call.1} parent=1 // pred_check_branch
      %178 = sbr.rel (0) target = $region93
    $region92: #{tpu_custom_call.1} parent=1 // pred_region
      %180 = dma.done [#allocation15], 2048
    $region93: #{tpu_custom_call.1} parent=1 // pred_fallthru
      _
    // Predicated region
    $region94: #{tpu_custom_call.1} parent=1 // pred_check
      _
    $region95: #{tpu_custom_call.1} parent=1 // pred_check_branch
      %182 = sbr.rel (0) target = $region97
    $region96: #{tpu_custom_call.1} parent=1 // pred_region
      %184 = dma.done [#allocation15], 4096
    $region97: #{tpu_custom_call.1} parent=1 // pred_fallthru
      _
    %v185 = vld [vmem:[#allocation2] sm:$0xff]
    %v186 = vld [vmem:[#allocation5] sm:$0xff]
    %v187 = vld [vmem:[#allocation5 + $0x8] sm:$0xff]
    %v188 = vld [vmem:[#allocation5 + $0x10] sm:$0xff]
    %v189 = vld [vmem:[#allocation5 + $0x18] sm:$0xff]
    %v190 = vld [vmem:[#allocation7] sm:$0xf]
    %v192 = vperm.slane %v190, 0
    %v193 = vperm.slane %v190, 1
    %v194 = vperm.slane %v190, 2
    %v195 = vperm.slane %v190, 3
    %vm200 = vcmask 64512
    %v202 = vsel %vm200, %v185, 0
    %204 = vmatpush.msra.mxu0 0.0
    %205 = vmatpush.msra.mxu0 0.0
    %206 = vmatpush.msra.mxu0 0.0
    %207 = vmatpush.msra.mxu0 0.0
    %208 = vmatpush.msra.mxu0 0.0
    %209 = vmatpush.msra.mxu0 0.0
    %210 = vmatpush.msra.mxu0 0.0
    %211 = vmatpush.msra.mxu0 0.0
    %212 = vmatpush.msra.mxu0 0.0
    %213 = vmatpush.msra.mxu0 0.0
    %214 = vmatpush.msra.mxu0 0.0
    %215 = vmatpush.msra.mxu0 0.0
    %216 = vmatpush.msra.mxu0 0.0
    %217 = vmatpush.msra.mxu0 0.0
    %218 = vmatpush.msra.mxu0 0.0
    %219 = vmatpush.msra.mxu0 %v186
    %220 = vmatmul.f32.gmra.mxu0 %v202
    %v221 = vpop.f32.mrf.mxu0
    %v222 = vadd.f32 %v192, %v221
    %223 = vdwg.mxu0
    %224 = vmatpush.msra.mxu0 0.0
    %225 = vmatpush.msra.mxu0 0.0
    %226 = vmatpush.msra.mxu0 0.0
    %227 = vmatpush.msra.mxu0 0.0
    %228 = vmatpush.msra.mxu0 0.0
    %229 = vmatpush.msra.mxu0 0.0
    %230 = vmatpush.msra.mxu0 0.0
    %231 = vmatpush.msra.mxu0 0.0
    %232 = vmatpush.msra.mxu0 0.0
    %233 = vmatpush.msra.mxu0 0.0
    %234 = vmatpush.msra.mxu0 0.0
    %235 = vmatpush.msra.mxu0 0.0
    %236 = vmatpush.msra.mxu0 0.0
    %237 = vmatpush.msra.mxu0 0.0
    %238 = vmatpush.msra.mxu0 0.0
    %239 = vmatpush.msra.mxu0 %v187
    %240 = vmatmul.f32.gmra.mxu0 %v202
    %v241 = vpop.f32.mrf.mxu0
    %v242 = vadd.f32 %v193, %v241
    %243 = vdwg.mxu0
    %244 = vmatpush.msra.mxu0 0.0
    %245 = vmatpush.msra.mxu0 0.0
    %246 = vmatpush.msra.mxu0 0.0
    %247 = vmatpush.msra.mxu0 0.0
    %248 = vmatpush.msra.mxu0 0.0
    %249 = vmatpush.msra.mxu0 0.0
    %250 = vmatpush.msra.mxu0 0.0
    %251 = vmatpush.msra.mxu0 0.0
    %252 = vmatpush.msra.mxu0 0.0
    %253 = vmatpush.msra.mxu0 0.0
    %254 = vmatpush.msra.mxu0 0.0
    %255 = vmatpush.msra.mxu0 0.0
    %256 = vmatpush.msra.mxu0 0.0
    %257 = vmatpush.msra.mxu0 0.0
    %258 = vmatpush.msra.mxu0 0.0
    %259 = vmatpush.msra.mxu0 %v188
    %260 = vmatmul.f32.gmra.mxu0 %v202
    %v261 = vpop.f32.mrf.mxu0
    %v262 = vadd.f32 %v194, %v261
    %263 = vdwg.mxu0
    %264 = vmatpush.msra.mxu0 0.0
    %265 = vmatpush.msra.mxu0 0.0
    %266 = vmatpush.msra.mxu0 0.0
    %267 = vmatpush.msra.mxu0 0.0
    %268 = vmatpush.msra.mxu0 0.0
    %269 = vmatpush.msra.mxu0 0.0
    %270 = vmatpush.msra.mxu0 0.0
    %271 = vmatpush.msra.mxu0 0.0
    %272 = vmatpush.msra.mxu0 0.0
    %273 = vmatpush.msra.mxu0 0.0
    %274 = vmatpush.msra.mxu0 0.0
    %275 = vmatpush.msra.mxu0 0.0
    %276 = vmatpush.msra.mxu0 0.0
    %277 = vmatpush.msra.mxu0 0.0
    %278 = vmatpush.msra.mxu0 0.0
    %279 = vmatpush.msra.mxu0 %v189
    %280 = vmatmul.f32.gmra.mxu0 %v202
    %v281 = vpop.f32.mrf.mxu0
    %v282 = vadd.f32 %v195, %v281
    %283 = vdwg.mxu0
    %v284 = vmul.f32 %v222, 0.2
    %v285 = vmul.f32 %v242, 0.2
    %v286 = vmul.f32 %v262, 0.2
    %v287 = vmul.f32 %v282, 0.2
    %v288 = vmax.f32 %v222, %v284
    %v289 = vmax.f32 %v242, %v285
    %v290 = vmax.f32 %v262, %v286
    %v291 = vmax.f32 %v282, %v287
    %v292 = vld [vmem:[#allocation8] sm:$0xff]
    %v293 = vld [vmem:[#allocation8 + $0x8] sm:$0xff]
    %v294 = vld [vmem:[#allocation8 + $0x10] sm:$0xff]
    %v295 = vld [vmem:[#allocation8 + $0x18] sm:$0xff]
    %v296 = vld [vmem:[#allocation8 + $0x20] sm:$0xff]
    %v297 = vld [vmem:[#allocation8 + $0x28] sm:$0xff]
    %v298 = vld [vmem:[#allocation8 + $0x30] sm:$0xff]
    %v299 = vld [vmem:[#allocation8 + $0x38] sm:$0xff]
    %v300 = vld [vmem:[#allocation8 + $0x40] sm:$0xff]
    %v301 = vld [vmem:[#allocation8 + $0x48] sm:$0xff]
    %v302 = vld [vmem:[#allocation8 + $0x50] sm:$0xff]
    %v303 = vld [vmem:[#allocation8 + $0x58] sm:$0xff]
    %v304 = vld [vmem:[#allocation8 + $0x60] sm:$0xff]
    %v305 = vld [vmem:[#allocation8 + $0x68] sm:$0xff]
    %v306 = vld [vmem:[#allocation8 + $0x70] sm:$0xff]
    %v307 = vld [vmem:[#allocation8 + $0x78] sm:$0xff]
    %v308 = vld [vmem:[#allocation8 + $0x80] sm:$0xff]
    %v309 = vld [vmem:[#allocation8 + $0x88] sm:$0xff]
    %v310 = vld [vmem:[#allocation8 + $0x90] sm:$0xff]
    %v311 = vld [vmem:[#allocation8 + $0x98] sm:$0xff]
    %v312 = vld [vmem:[#allocation8 + $0xa0] sm:$0xff]
    %v313 = vld [vmem:[#allocation8 + $0xa8] sm:$0xff]
    %v314 = vld [vmem:[#allocation8 + $0xb0] sm:$0xff]
    %v315 = vld [vmem:[#allocation8 + $0xb8] sm:$0xff]
    %v316 = vld [vmem:[#allocation8 + $0xc0] sm:$0xff]
    %v317 = vld [vmem:[#allocation8 + $0xc8] sm:$0xff]
    %v318 = vld [vmem:[#allocation8 + $0xd0] sm:$0xff]
    %v319 = vld [vmem:[#allocation8 + $0xd8] sm:$0xff]
    %v320 = vld [vmem:[#allocation8 + $0xe0] sm:$0xff]
    %v321 = vld [vmem:[#allocation8 + $0xe8] sm:$0xff]
    %v322 = vld [vmem:[#allocation8 + $0xf0] sm:$0xff]
    %v323 = vld [vmem:[#allocation8 + $0xf8] sm:$0xff]
    %v324 = vld [vmem:[#allocation8 + $0x100] sm:$0xff]
    %v325 = vld [vmem:[#allocation8 + $0x108] sm:$0xff]
    %v326 = vld [vmem:[#allocation8 + $0x110] sm:$0xff]
    %v327 = vld [vmem:[#allocation8 + $0x118] sm:$0xff]
    %v328 = vld [vmem:[#allocation8 + $0x120] sm:$0xff]
    %v329 = vld [vmem:[#allocation8 + $0x128] sm:$0xff]
    %v330 = vld [vmem:[#allocation8 + $0x130] sm:$0xff]
    %v331 = vld [vmem:[#allocation8 + $0x138] sm:$0xff]
    %v332 = vld [vmem:[#allocation8 + $0x140] sm:$0xff]
    %v333 = vld [vmem:[#allocation8 + $0x148] sm:$0xff]
    %v334 = vld [vmem:[#allocation8 + $0x150] sm:$0xff]
    %v335 = vld [vmem:[#allocation8 + $0x158] sm:$0xff]
    %v336 = vld [vmem:[#allocation8 + $0x160] sm:$0xff]
    %v337 = vld [vmem:[#allocation8 + $0x168] sm:$0xff]
    %v338 = vld [vmem:[#allocation8 + $0x170] sm:$0xff]
    %v339 = vld [vmem:[#allocation8 + $0x178] sm:$0xff]
    %v340 = vld [vmem:[#allocation8 + $0x180] sm:$0xff]
    %v341 = vld [vmem:[#allocation8 + $0x188] sm:$0xff]
    %v342 = vld [vmem:[#allocation8 + $0x190] sm:$0xff]
    %v343 = vld [vmem:[#allocation8 + $0x198] sm:$0xff]
    %v344 = vld [vmem:[#allocation8 + $0x1a0] sm:$0xff]
    %v345 = vld [vmem:[#allocation8 + $0x1a8] sm:$0xff]
    %v346 = vld [vmem:[#allocation8 + $0x1b0] sm:$0xff]
    %v347 = vld [vmem:[#allocation8 + $0x1b8] sm:$0xff]
    %v348 = vld [vmem:[#allocation8 + $0x1c0] sm:$0xff]
    %v349 = vld [vmem:[#allocation8 + $0x1c8] sm:$0xff]
    %v350 = vld [vmem:[#allocation8 + $0x1d0] sm:$0xff]
    %v351 = vld [vmem:[#allocation8 + $0x1d8] sm:$0xff]
    %v352 = vld [vmem:[#allocation8 + $0x1e0] sm:$0xff]
    %v353 = vld [vmem:[#allocation8 + $0x1e8] sm:$0xff]
    %v354 = vld [vmem:[#allocation8 + $0x1f0] sm:$0xff]
    %v355 = vld [vmem:[#allocation8 + $0x1f8] sm:$0xff]
    %v356 = vld [vmem:[#allocation8 + $0x200] sm:$0xff]
    %v357 = vld [vmem:[#allocation8 + $0x208] sm:$0xff]
    %v358 = vld [vmem:[#allocation8 + $0x210] sm:$0xff]
    %v359 = vld [vmem:[#allocation8 + $0x218] sm:$0xff]
    %v360 = vld [vmem:[#allocation8 + $0x220] sm:$0xff]
    %v361 = vld [vmem:[#allocation8 + $0x228] sm:$0xff]
    %v362 = vld [vmem:[#allocation8 + $0x230] sm:$0xff]
    %v363 = vld [vmem:[#allocation8 + $0x238] sm:$0xff]
    %v364 = vld [vmem:[#allocation8 + $0x240] sm:$0xff]
    %v365 = vld [vmem:[#allocation8 + $0x248] sm:$0xff]
    %v366 = vld [vmem:[#allocation8 + $0x250] sm:$0xff]
    %v367 = vld [vmem:[#allocation8 + $0x258] sm:$0xff]
    %v368 = vld [vmem:[#allocation8 + $0x260] sm:$0xff]
    %v369 = vld [vmem:[#allocation8 + $0x268] sm:$0xff]
    %v370 = vld [vmem:[#allocation8 + $0x270] sm:$0xff]
    %v371 = vld [vmem:[#allocation8 + $0x278] sm:$0xff]
    %v372 = vld [vmem:[#allocation8 + $0x280] sm:$0xff]
    %v373 = vld [vmem:[#allocation8 + $0x288] sm:$0xff]
    %v374 = vld [vmem:[#allocation8 + $0x290] sm:$0xff]
    %v375 = vld [vmem:[#allocation8 + $0x298] sm:$0xff]
    %v376 = vld [vmem:[#allocation8 + $0x2a0] sm:$0xff]
    %v377 = vld [vmem:[#allocation8 + $0x2a8] sm:$0xff]
    %v378 = vld [vmem:[#allocation8 + $0x2b0] sm:$0xff]
    %v379 = vld [vmem:[#allocation8 + $0x2b8] sm:$0xff]
    %v380 = vld [vmem:[#allocation8 + $0x2c0] sm:$0xff]
    %v381 = vld [vmem:[#allocation8 + $0x2c8] sm:$0xff]
    %v382 = vld [vmem:[#allocation8 + $0x2d0] sm:$0xff]
    %v383 = vld [vmem:[#allocation8 + $0x2d8] sm:$0xff]
    %v384 = vld [vmem:[#allocation8 + $0x2e0] sm:$0xff]
    %v385 = vld [vmem:[#allocation8 + $0x2e8] sm:$0xff]
    %v386 = vld [vmem:[#allocation8 + $0x2f0] sm:$0xff]
    %v387 = vld [vmem:[#allocation8 + $0x2f8] sm:$0xff]
    %v388 = vld [vmem:[#allocation8 + $0x300] sm:$0xff]
    %v389 = vld [vmem:[#allocation8 + $0x308] sm:$0xff]
    %v390 = vld [vmem:[#allocation8 + $0x310] sm:$0xff]
    %v391 = vld [vmem:[#allocation8 + $0x318] sm:$0xff]
    %v392 = vld [vmem:[#allocation8 + $0x320] sm:$0xff]
    %v393 = vld [vmem:[#allocation8 + $0x328] sm:$0xff]
    %v394 = vld [vmem:[#allocation8 + $0x330] sm:$0xff]
    %v395 = vld [vmem:[#allocation8 + $0x338] sm:$0xff]
    %v396 = vld [vmem:[#allocation8 + $0x340] sm:$0xff]
    %v397 = vld [vmem:[#allocation8 + $0x348] sm:$0xff]
    %v398 = vld [vmem:[#allocation8 + $0x350] sm:$0xff]
    %v399 = vld [vmem:[#allocation8 + $0x358] sm:$0xff]
    %v400 = vld [vmem:[#allocation8 + $0x360] sm:$0xff]
    %v401 = vld [vmem:[#allocation8 + $0x368] sm:$0xff]
    %v402 = vld [vmem:[#allocation8 + $0x370] sm:$0xff]
    %v403 = vld [vmem:[#allocation8 + $0x378] sm:$0xff]
    %v404 = vld [vmem:[#allocation8 + $0x380] sm:$0xff]
    %v405 = vld [vmem:[#allocation8 + $0x388] sm:$0xff]
    %v406 = vld [vmem:[#allocation8 + $0x390] sm:$0xff]
    %v407 = vld [vmem:[#allocation8 + $0x398] sm:$0xff]
    %v408 = vld [vmem:[#allocation8 + $0x3a0] sm:$0xff]
    %v409 = vld [vmem:[#allocation8 + $0x3a8] sm:$0xff]
    %v410 = vld [vmem:[#allocation8 + $0x3b0] sm:$0xff]
    %v411 = vld [vmem:[#allocation8 + $0x3b8] sm:$0xff]
    %v412 = vld [vmem:[#allocation8 + $0x3c0] sm:$0xff]
    %v413 = vld [vmem:[#allocation8 + $0x3c8] sm:$0xff]
    %v414 = vld [vmem:[#allocation8 + $0x3d0] sm:$0xff]
    %v415 = vld [vmem:[#allocation8 + $0x3d8] sm:$0xff]
    %v416 = vld [vmem:[#allocation8 + $0x3e0] sm:$0xff]
    %v417 = vld [vmem:[#allocation8 + $0x3e8] sm:$0xff]
    %v418 = vld [vmem:[#allocation8 + $0x3f0] sm:$0xff]
    %v419 = vld [vmem:[#allocation8 + $0x3f8] sm:$0xff]
    %v420 = vld [vmem:[%s4] sm:$0x3]
    %v422 = vperm.slane %v420, 0
    %v423 = vperm.slane %v420, 1
    %426 = vmatpush.msra.mxu0 %v322
    %427 = vmatpush.msra.mxu0 %v320
    %428 = vmatpush.msra.mxu0 %v318
    %429 = vmatpush.msra.mxu0 %v316
    %430 = vmatpush.msra.mxu0 %v314
    %431 = vmatpush.msra.mxu0 %v312
    %432 = vmatpush.msra.mxu0 %v310
    %433 = vmatpush.msra.mxu0 %v308
    %434 = vmatpush.msra.mxu0 %v306
    %435 = vmatpush.msra.mxu0 %v304
    %436 = vmatpush.msra.mxu0 %v302
    %437 = vmatpush.msra.mxu0 %v300
    %438 = vmatpush.msra.mxu0 %v298
    %439 = vmatpush.msra.mxu0 %v296
    %440 = vmatpush.msra.mxu0 %v294
    %441 = vmatpush.msra.mxu0 %v292
    %442 = vmatmul.f32.gmra.mxu0 %v288
    %v443 = vpop.f32.mrf.mxu0
    %v444 = vadd.f32 %v422, %v443
    %445 = vdwg.mxu0
    %446 = vmatpush.msra.mxu0 %v354
    %447 = vmatpush.msra.mxu0 %v352
    %448 = vmatpush.msra.mxu0 %v350
    %449 = vmatpush.msra.mxu0 %v348
    %450 = vmatpush.msra.mxu0 %v346
    %451 = vmatpush.msra.mxu0 %v344
    %452 = vmatpush.msra.mxu0 %v342
    %453 = vmatpush.msra.mxu0 %v340
    %454 = vmatpush.msra.mxu0 %v338
    %455 = vmatpush.msra.mxu0 %v336
    %456 = vmatpush.msra.mxu0 %v334
    %457 = vmatpush.msra.mxu0 %v332
    %458 = vmatpush.msra.mxu0 %v330
    %459 = vmatpush.msra.mxu0 %v328
    %460 = vmatpush.msra.mxu0 %v326
    %461 = vmatpush.msra.mxu0 %v324
    %462 = vmatmul.f32.gmra.mxu0 %v289
    %v463 = vpop.f32.mrf.mxu0
    %v464 = vadd.f32 %v444, %v463
    %465 = vdwg.mxu0
    %466 = vmatpush.msra.mxu0 %v386
    %467 = vmatpush.msra.mxu0 %v384
    %468 = vmatpush.msra.mxu0 %v382
    %469 = vmatpush.msra.mxu0 %v380
    %470 = vmatpush.msra.mxu0 %v378
    %471 = vmatpush.msra.mxu0 %v376
    %472 = vmatpush.msra.mxu0 %v374
    %473 = vmatpush.msra.mxu0 %v372
    %474 = vmatpush.msra.mxu0 %v370
    %475 = vmatpush.msra.mxu0 %v368
    %476 = vmatpush.msra.mxu0 %v366
    %477 = vmatpush.msra.mxu0 %v364
    %478 = vmatpush.msra.mxu0 %v362
    %479 = vmatpush.msra.mxu0 %v360
    %480 = vmatpush.msra.mxu0 %v358
    %481 = vmatpush.msra.mxu0 %v356
    %482 = vmatmul.f32.gmra.mxu0 %v290
    %v483 = vpop.f32.mrf.mxu0
    %v484 = vadd.f32 %v464, %v483
    %485 = vdwg.mxu0
    %486 = vmatpush.msra.mxu0 %v418
    %487 = vmatpush.msra.mxu0 %v416
    %488 = vmatpush.msra.mxu0 %v414
    %489 = vmatpush.msra.mxu0 %v412
    %490 = vmatpush.msra.mxu0 %v410
    %491 = vmatpush.msra.mxu0 %v408
    %492 = vmatpush.msra.mxu0 %v406
    %493 = vmatpush.msra.mxu0 %v404
    %494 = vmatpush.msra.mxu0 %v402
    %495 = vmatpush.msra.mxu0 %v400
    %496 = vmatpush.msra.mxu0 %v398
    %497 = vmatpush.msra.mxu0 %v396
    %498 = vmatpush.msra.mxu0 %v394
    %499 = vmatpush.msra.mxu0 %v392
    %500 = vmatpush.msra.mxu0 %v390
    %501 = vmatpush.msra.mxu0 %v388
    %502 = vmatmul.f32.gmra.mxu0 %v291
    %v503 = vpop.f32.mrf.mxu0
    %v504 = vadd.f32 %v484, %v503
    %505 = vdwg.mxu0
    %506 = vmatpush.msra.mxu0 %v323
    %507 = vmatpush.msra.mxu0 %v321
    %508 = vmatpush.msra.mxu0 %v319
    %509 = vmatpush.msra.mxu0 %v317
    %510 = vmatpush.msra.mxu0 %v315
    %511 = vmatpush.msra.mxu0 %v313
    %512 = vmatpush.msra.mxu0 %v311
    %513 = vmatpush.msra.mxu0 %v309
    %514 = vmatpush.msra.mxu0 %v307
    %515 = vmatpush.msra.mxu0 %v305
    %516 = vmatpush.msra.mxu0 %v303
    %517 = vmatpush.msra.mxu0 %v301
    %518 = vmatpush.msra.mxu0 %v299
    %519 = vmatpush.msra.mxu0 %v297
    %520 = vmatpush.msra.mxu0 %v295
    %521 = vmatpush.msra.mxu0 %v293
    %522 = vmatmul.f32.gmra.mxu0 %v288
    %v523 = vpop.f32.mrf.mxu0
    %v524 = vadd.f32 %v423, %v523
    %525 = vdwg.mxu0
    %526 = vmatpush.msra.mxu0 %v355
    %527 = vmatpush.msra.mxu0 %v353
    %528 = vmatpush.msra.mxu0 %v351
    %529 = vmatpush.msra.mxu0 %v349
    %530 = vmatpush.msra.mxu0 %v347
    %531 = vmatpush.msra.mxu0 %v345
    %532 = vmatpush.msra.mxu0 %v343
    %533 = vmatpush.msra.mxu0 %v341
    %534 = vmatpush.msra.mxu0 %v339
    %535 = vmatpush.msra.mxu0 %v337
    %536 = vmatpush.msra.mxu0 %v335
    %537 = vmatpush.msra.mxu0 %v333
    %538 = vmatpush.msra.mxu0 %v331
    %539 = vmatpush.msra.mxu0 %v329
    %540 = vmatpush.msra.mxu0 %v327
    %541 = vmatpush.msra.mxu0 %v325
    %542 = vmatmul.f32.gmra.mxu0 %v289
    %v543 = vpop.f32.mrf.mxu0
    %v544 = vadd.f32 %v524, %v543
    %545 = vdwg.mxu0
    %546 = vmatpush.msra.mxu0 %v387
    %547 = vmatpush.msra.mxu0 %v385
    %548 = vmatpush.msra.mxu0 %v383
    %549 = vmatpush.msra.mxu0 %v381
    %550 = vmatpush.msra.mxu0 %v379
    %551 = vmatpush.msra.mxu0 %v377
    %552 = vmatpush.msra.mxu0 %v375
    %553 = vmatpush.msra.mxu0 %v373
    %554 = vmatpush.msra.mxu0 %v371
    %555 = vmatpush.msra.mxu0 %v369
    %556 = vmatpush.msra.mxu0 %v367
    %557 = vmatpush.msra.mxu0 %v365
    %558 = vmatpush.msra.mxu0 %v363
    %559 = vmatpush.msra.mxu0 %v361
    %560 = vmatpush.msra.mxu0 %v359
    %561 = vmatpush.msra.mxu0 %v357
    %562 = vmatmul.f32.gmra.mxu0 %v290
    %v563 = vpop.f32.mrf.mxu0
    %v564 = vadd.f32 %v544, %v563
    %565 = vdwg.mxu0
    %566 = vmatpush.msra.mxu0 %v419
    %567 = vmatpush.msra.mxu0 %v417
    %568 = vmatpush.msra.mxu0 %v415
    %569 = vmatpush.msra.mxu0 %v413
    %570 = vmatpush.msra.mxu0 %v411
    %571 = vmatpush.msra.mxu0 %v409
    %572 = vmatpush.msra.mxu0 %v407
    %573 = vmatpush.msra.mxu0 %v405
    %574 = vmatpush.msra.mxu0 %v403
    %575 = vmatpush.msra.mxu0 %v401
    %576 = vmatpush.msra.mxu0 %v399
    %577 = vmatpush.msra.mxu0 %v397
    %578 = vmatpush.msra.mxu0 %v395
    %579 = vmatpush.msra.mxu0 %v393
    %580 = vmatpush.msra.mxu0 %v391
    %581 = vmatpush.msra.mxu0 %v389
    %582 = vmatmul.f32.gmra.mxu0 %v291
    %v583 = vpop.f32.mrf.mxu0
    %v584 = vadd.f32 %v564, %v583
    %585 = vdwg.mxu0
    %v586 = vmul.f32 %v504, 0.2
    %v587 = vmul.f32 %v584, 0.2
    %v588 = vmax.f32 %v504, %v586
    %v589 = vmax.f32 %v584, %v587
    %v590 = vld [vmem:[#allocation10] sm:$0xff]
    %v591 = vld [vmem:[#allocation10 + $0x8] sm:$0xff]
    %v592 = vld [vmem:[#allocation10 + $0x10] sm:$0xff]
    %v593 = vld [vmem:[#allocation10 + $0x18] sm:$0xff]
    %v594 = vld [vmem:[#allocation10 + $0x20] sm:$0xff]
    %v595 = vld [vmem:[#allocation10 + $0x28] sm:$0xff]
    %v596 = vld [vmem:[#allocation10 + $0x30] sm:$0xff]
    %v597 = vld [vmem:[#allocation10 + $0x38] sm:$0xff]
    %v598 = vld [vmem:[#allocation10 + $0x40] sm:$0xff]
    %v599 = vld [vmem:[#allocation10 + $0x48] sm:$0xff]
    %v600 = vld [vmem:[#allocation10 + $0x50] sm:$0xff]
    %v601 = vld [vmem:[#allocation10 + $0x58] sm:$0xff]
    %v602 = vld [vmem:[#allocation10 + $0x60] sm:$0xff]
    %v603 = vld [vmem:[#allocation10 + $0x68] sm:$0xff]
    %v604 = vld [vmem:[#allocation10 + $0x70] sm:$0xff]
    %v605 = vld [vmem:[#allocation10 + $0x78] sm:$0xff]
    %v606 = vld [vmem:[#allocation10 + $0x80] sm:$0xff]
    %v607 = vld [vmem:[#allocation10 + $0x88] sm:$0xff]
    %v608 = vld [vmem:[#allocation10 + $0x90] sm:$0xff]
    %v609 = vld [vmem:[#allocation10 + $0x98] sm:$0xff]
    %v610 = vld [vmem:[#allocation10 + $0xa0] sm:$0xff]
    %v611 = vld [vmem:[#allocation10 + $0xa8] sm:$0xff]
    %v612 = vld [vmem:[#allocation10 + $0xb0] sm:$0xff]
    %v613 = vld [vmem:[#allocation10 + $0xb8] sm:$0xff]
    %v614 = vld [vmem:[#allocation10 + $0xc0] sm:$0xff]
    %v615 = vld [vmem:[#allocation10 + $0xc8] sm:$0xff]
    %v616 = vld [vmem:[#allocation10 + $0xd0] sm:$0xff]
    %v617 = vld [vmem:[#allocation10 + $0xd8] sm:$0xff]
    %v618 = vld [vmem:[#allocation10 + $0xe0] sm:$0xff]
    %v619 = vld [vmem:[#allocation10 + $0xe8] sm:$0xff]
    %v620 = vld [vmem:[#allocation10 + $0xf0] sm:$0xff]
    %v621 = vld [vmem:[#allocation10 + $0xf8] sm:$0xff]
    %v622 = vld [vmem:[%s6] sm:$0x1]
    %v624 = vperm.slane %v622, 0
    %626 = vmatpush.msra.mxu0 %v605
    %627 = vmatpush.msra.mxu0 %v604
    %628 = vmatpush.msra.mxu0 %v603
    %629 = vmatpush.msra.mxu0 %v602
    %630 = vmatpush.msra.mxu0 %v601
    %631 = vmatpush.msra.mxu0 %v600
    %632 = vmatpush.msra.mxu0 %v599
    %633 = vmatpush.msra.mxu0 %v598
    %634 = vmatpush.msra.mxu0 %v597
    %635 = vmatpush.msra.mxu0 %v596
    %636 = vmatpush.msra.mxu0 %v595
    %637 = vmatpush.msra.mxu0 %v594
    %638 = vmatpush.msra.mxu0 %v593
    %639 = vmatpush.msra.mxu0 %v592
    %640 = vmatpush.msra.mxu0 %v591
    %641 = vmatpush.msra.mxu0 %v590
    %642 = vmatmul.f32.gmra.mxu0 %v588
    %v643 = vpop.f32.mrf.mxu0
    %v644 = vadd.f32 %v624, %v643
    %645 = vdwg.mxu0
    %646 = vmatpush.msra.mxu0 %v621
    %647 = vmatpush.msra.mxu0 %v620
    %648 = vmatpush.msra.mxu0 %v619
    %649 = vmatpush.msra.mxu0 %v618
    %650 = vmatpush.msra.mxu0 %v617
    %651 = vmatpush.msra.mxu0 %v616
    %652 = vmatpush.msra.mxu0 %v615
    %653 = vmatpush.msra.mxu0 %v614
    %654 = vmatpush.msra.mxu0 %v613
    %655 = vmatpush.msra.mxu0 %v612
    %656 = vmatpush.msra.mxu0 %v611
    %657 = vmatpush.msra.mxu0 %v610
    %658 = vmatpush.msra.mxu0 %v609
    %659 = vmatpush.msra.mxu0 %v608
    %660 = vmatpush.msra.mxu0 %v607
    %661 = vmatpush.msra.mxu0 %v606
    %662 = vmatmul.f32.gmra.mxu0 %v589
    %v663 = vpop.f32.mrf.mxu0
    %v664 = vadd.f32 %v644, %v663
    %665 = vdwg.mxu0
    %v666 = vmul.f32 %v664, 0.2
    %v667 = vmax.f32 %v664, %v666
    %v668 = vld [vmem:[#allocation11] sm:$0xff]
    %v669 = vld [vmem:[#allocation11 + $0x8] sm:$0xff]
    %v670 = vld [vmem:[#allocation11 + $0x10] sm:$0xff]
    %v671 = vld [vmem:[#allocation11 + $0x18] sm:$0xff]
    %v672 = vld [vmem:[#allocation11 + $0x20] sm:$0xff]
    %v673 = vld [vmem:[#allocation11 + $0x28] sm:$0xff]
    %v674 = vld [vmem:[#allocation11 + $0x30] sm:$0xff]
    %v675 = vld [vmem:[#allocation11 + $0x38] sm:$0xff]
    %v676 = vld [vmem:[#allocation11 + $0x40] sm:$0xff]
    %v677 = vld [vmem:[#allocation11 + $0x48] sm:$0xff]
    %v678 = vld [vmem:[#allocation11 + $0x50] sm:$0xff]
    %v679 = vld [vmem:[#allocation11 + $0x58] sm:$0xff]
    %v680 = vld [vmem:[#allocation11 + $0x60] sm:$0xff]
    %v681 = vld [vmem:[#allocation11 + $0x68] sm:$0xff]
    %v682 = vld [vmem:[#allocation11 + $0x70] sm:$0xff]
    %v683 = vld [vmem:[#allocation11 + $0x78] sm:$0xff]
    %v684 = vld [vmem:[%s8] sm:$0x1]
    %v686 = vperm.slane %v684, 0
    %688 = vmatpush.msra.mxu0 %v683
    %689 = vmatpush.msra.mxu0 %v682
    %690 = vmatpush.msra.mxu0 %v681
    %691 = vmatpush.msra.mxu0 %v680
    %692 = vmatpush.msra.mxu0 %v679
    %693 = vmatpush.msra.mxu0 %v678
    %694 = vmatpush.msra.mxu0 %v677
    %695 = vmatpush.msra.mxu0 %v676
    %696 = vmatpush.msra.mxu0 %v675
    %697 = vmatpush.msra.mxu0 %v674
    %698 = vmatpush.msra.mxu0 %v673
    %699 = vmatpush.msra.mxu0 %v672
    %700 = vmatpush.msra.mxu0 %v671
    %701 = vmatpush.msra.mxu0 %v670
    %702 = vmatpush.msra.mxu0 %v669
    %703 = vmatpush.msra.mxu0 %v668
    %704 = vmatmul.f32.gmra.mxu0 %v667
    %v705 = vpop.f32.mrf.mxu0
    %v706 = vadd.f32 %v686, %v705
    %707 = vdwg.mxu0
    %v708 = vmul.f32 %v706, 0.2
    %v709 = vmax.f32 %v706, %v708
    %v710 = vld [vmem:[#allocation13] sm:$0xff]
    %v711 = vld [vmem:[#allocation13 + $0x8] sm:$0xff]
    %v712 = vld [vmem:[#allocation13 + $0x10] sm:$0xff]
    %v713 = vld [vmem:[#allocation13 + $0x18] sm:$0xff]
    %v714 = vld [vmem:[#allocation13 + $0x20] sm:$0xff]
    %v715 = vld [vmem:[#allocation13 + $0x28] sm:$0xff]
    %v716 = vld [vmem:[#allocation13 + $0x30] sm:$0xff]
    %v717 = vld [vmem:[#allocation13 + $0x38] sm:$0xff]
    %v718 = vld [vmem:[#allocation13 + $0x40] sm:$0xff]
    %v719 = vld [vmem:[#allocation13 + $0x48] sm:$0xff]
    %v720 = vld [vmem:[#allocation13 + $0x50] sm:$0xff]
    %v721 = vld [vmem:[#allocation13 + $0x58] sm:$0xff]
    %v722 = vld [vmem:[#allocation13 + $0x60] sm:$0xff]
    %v723 = vld [vmem:[#allocation13 + $0x68] sm:$0xff]
    %v724 = vld [vmem:[#allocation13 + $0x70] sm:$0xff]
    %v725 = vld [vmem:[#allocation13 + $0x78] sm:$0xff]
    %v726 = vld [vmem:[%s10] sm:$0x1]
    %v728 = vperm.slane %v726, 0
    %730 = vmatpush.msra.mxu0 %v725
    %731 = vmatpush.msra.mxu0 %v724
    %732 = vmatpush.msra.mxu0 %v723
    %733 = vmatpush.msra.mxu0 %v722
    %734 = vmatpush.msra.mxu0 %v721
    %735 = vmatpush.msra.mxu0 %v720
    %736 = vmatpush.msra.mxu0 %v719
    %737 = vmatpush.msra.mxu0 %v718
    %738 = vmatpush.msra.mxu0 %v717
    %739 = vmatpush.msra.mxu0 %v716
    %740 = vmatpush.msra.mxu0 %v715
    %741 = vmatpush.msra.mxu0 %v714
    %742 = vmatpush.msra.mxu0 %v713
    %743 = vmatpush.msra.mxu0 %v712
    %744 = vmatpush.msra.mxu0 %v711
    %745 = vmatpush.msra.mxu0 %v710
    %746 = vmatmul.f32.gmra.mxu0 %v709
    %v747 = vpop.f32.mrf.mxu0
    %v748 = vadd.f32 %v728, %v747
    %749 = vdwg.mxu0
    %v750 = vmul.f32 %v748, 0.2
    %v751 = vmax.f32 %v748, %v750
    %v752 = vld [vmem:[#allocation14] sm:$0xff]
    %v753 = vld [vmem:[#allocation14 + $0x8] sm:$0xff]
    %v754 = vld [vmem:[#allocation14 + $0x10] sm:$0xff]
    %v755 = vld [vmem:[#allocation14 + $0x18] sm:$0xff]
    %v756 = vld [vmem:[#allocation14 + $0x20] sm:$0xff]
    %v757 = vld [vmem:[#allocation14 + $0x28] sm:$0xff]
    %v758 = vld [vmem:[#allocation14 + $0x30] sm:$0xff]
    %v759 = vld [vmem:[#allocation14 + $0x38] sm:$0xff]
    %v760 = vld [vmem:[#allocation14 + $0x40] sm:$0xff]
    %v761 = vld [vmem:[#allocation14 + $0x48] sm:$0xff]
    %v762 = vld [vmem:[#allocation14 + $0x50] sm:$0xff]
    %v763 = vld [vmem:[#allocation14 + $0x58] sm:$0xff]
    %v764 = vld [vmem:[#allocation14 + $0x60] sm:$0xff]
    %v765 = vld [vmem:[#allocation14 + $0x68] sm:$0xff]
    %v766 = vld [vmem:[#allocation14 + $0x70] sm:$0xff]
    %v767 = vld [vmem:[#allocation14 + $0x78] sm:$0xff]
    %v768 = vld [vmem:[%s12] sm:$0x1]
    %v770 = vperm.slane %v768, 0
    %772 = vmatpush.msra.mxu0 %v767
    %773 = vmatpush.msra.mxu0 %v766
    %774 = vmatpush.msra.mxu0 %v765
    %775 = vmatpush.msra.mxu0 %v764
    %776 = vmatpush.msra.mxu0 %v763
    %777 = vmatpush.msra.mxu0 %v762
    %778 = vmatpush.msra.mxu0 %v761
    %779 = vmatpush.msra.mxu0 %v760
    %780 = vmatpush.msra.mxu0 %v759
    %781 = vmatpush.msra.mxu0 %v758
    %782 = vmatpush.msra.mxu0 %v757
    %783 = vmatpush.msra.mxu0 %v756
    %784 = vmatpush.msra.mxu0 %v755
    %785 = vmatpush.msra.mxu0 %v754
    %786 = vmatpush.msra.mxu0 %v753
    %787 = vmatpush.msra.mxu0 %v752
    %788 = vmatmul.f32.gmra.mxu0 %v751
    %v789 = vpop.f32.mrf.mxu0
    %v790 = vadd.f32 %v770, %v789
    %791 = vdwg.mxu0
    %v792 = vmul.f32 %v790, 0.2
    %v793 = vmax.f32 %v790, %v792
    %v794 = vld [vmem:[#allocation16] sm:$0xff]
    %v795 = vld [vmem:[#allocation16 + $0x8] sm:$0xff]
    %v796 = vld [vmem:[#allocation16 + $0x10] sm:$0xff]
    %v797 = vld [vmem:[#allocation16 + $0x18] sm:$0xff]
    %v798 = vld [vmem:[#allocation16 + $0x20] sm:$0xff]
    %v799 = vld [vmem:[#allocation16 + $0x28] sm:$0xff]
    %v800 = vld [vmem:[#allocation16 + $0x30] sm:$0xff]
    %v801 = vld [vmem:[#allocation16 + $0x38] sm:$0xff]
    %v802 = vld [vmem:[#allocation16 + $0x40] sm:$0xff]
    %v803 = vld [vmem:[#allocation16 + $0x48] sm:$0xff]
    %v804 = vld [vmem:[#allocation16 + $0x50] sm:$0xff]
    %v805 = vld [vmem:[#allocation16 + $0x58] sm:$0xff]
    %v806 = vld [vmem:[#allocation16 + $0x60] sm:$0xff]
    %v807 = vld [vmem:[#allocation16 + $0x68] sm:$0xff]
    %v808 = vld [vmem:[#allocation16 + $0x70] sm:$0xff]
    %v809 = vld [vmem:[#allocation16 + $0x78] sm:$0xff]
    %v810 = vld [vmem:[#allocation16 + $0x80] sm:$0xff]
    %v811 = vld [vmem:[#allocation16 + $0x88] sm:$0xff]
    %v812 = vld [vmem:[#allocation16 + $0x90] sm:$0xff]
    %v813 = vld [vmem:[#allocation16 + $0x98] sm:$0xff]
    %v814 = vld [vmem:[#allocation16 + $0xa0] sm:$0xff]
    %v815 = vld [vmem:[#allocation16 + $0xa8] sm:$0xff]
    %v816 = vld [vmem:[#allocation16 + $0xb0] sm:$0xff]
    %v817 = vld [vmem:[#allocation16 + $0xb8] sm:$0xff]
    %v818 = vld [vmem:[#allocation16 + $0xc0] sm:$0xff]
    %v819 = vld [vmem:[#allocation16 + $0xc8] sm:$0xff]
    %v820 = vld [vmem:[#allocation16 + $0xd0] sm:$0xff]
    %v821 = vld [vmem:[#allocation16 + $0xd8] sm:$0xff]
    %v822 = vld [vmem:[#allocation16 + $0xe0] sm:$0xff]
    %v823 = vld [vmem:[#allocation16 + $0xe8] sm:$0xff]
    %v824 = vld [vmem:[#allocation16 + $0xf0] sm:$0xff]
    %v825 = vld [vmem:[#allocation16 + $0xf8] sm:$0xff]
    %v826 = vld [vmem:[%s14] sm:$0x3]
    %v828 = vperm.slane %v826, 0
    %v829 = vperm.slane %v826, 1
    %832 = vmatpush.msra.mxu0 %v824
    %833 = vmatpush.msra.mxu0 %v822
    %834 = vmatpush.msra.mxu0 %v820
    %835 = vmatpush.msra.mxu0 %v818
    %836 = vmatpush.msra.mxu0 %v816
    %837 = vmatpush.msra.mxu0 %v814
    %838 = vmatpush.msra.mxu0 %v812
    %839 = vmatpush.msra.mxu0 %v810
    %840 = vmatpush.msra.mxu0 %v808
    %841 = vmatpush.msra.mxu0 %v806
    %842 = vmatpush.msra.mxu0 %v804
    %843 = vmatpush.msra.mxu0 %v802
    %844 = vmatpush.msra.mxu0 %v800
    %845 = vmatpush.msra.mxu0 %v798
    %846 = vmatpush.msra.mxu0 %v796
    %847 = vmatpush.msra.mxu0 %v794
    %848 = vmatmul.f32.gmra.mxu0 %v793
    %v849 = vpop.f32.mrf.mxu0
    %v850 = vadd.f32 %v828, %v849
    %851 = vdwg.mxu0
    %852 = vmatpush.msra.mxu0 %v825
    %853 = vmatpush.msra.mxu0 %v823
    %854 = vmatpush.msra.mxu0 %v821
    %855 = vmatpush.msra.mxu0 %v819
    %856 = vmatpush.msra.mxu0 %v817
    %857 = vmatpush.msra.mxu0 %v815
    %858 = vmatpush.msra.mxu0 %v813
    %859 = vmatpush.msra.mxu0 %v811
    %860 = vmatpush.msra.mxu0 %v809
    %861 = vmatpush.msra.mxu0 %v807
    %862 = vmatpush.msra.mxu0 %v805
    %863 = vmatpush.msra.mxu0 %v803
    %864 = vmatpush.msra.mxu0 %v801
    %865 = vmatpush.msra.mxu0 %v799
    %866 = vmatpush.msra.mxu0 %v797
    %867 = vmatpush.msra.mxu0 %v795
    %868 = vmatmul.f32.gmra.mxu0 %v793
    %v869 = vpop.f32.mrf.mxu0
    %v870 = vadd.f32 %v829, %v869
    %871 = vdwg.mxu0
    %v872 = vtanh.pop %v850
    %v873 = vtanh.pop %v870
    %874 = vst [vmem:[#allocation17] sm:$0xff] %v872
    %875 = vst [vmem:[#allocation17 + $0x8] sm:$0xff] %v873
    // Predicated region
    $region98: #{tpu_custom_call.1} parent=1 // pred_check
      _
    $region99: #{tpu_custom_call.1} parent=1 // pred_check_branch
      %877 = sbr.rel (0) target = $region101
    $region100: #{tpu_custom_call.1} parent=1 // pred_region
      %879 = vsyncadd [#allocation4], 0
      %s881 = sshll.u32 [#allocation17], 4
      %s882 = int_to_ptr.vmem [resolvable:$true] %s881
      %s883 = sshll.u32 %s15, 4
      %s884 = int_to_ptr.hbm [resolvable:$true] %s883
      %886 = dma.vmem_to_hbm [thread:$0]  %s882, 256, %s884, [#allocation4]
    $region101: #{tpu_custom_call.1} parent=1 // pred_fallthru
      _
    // Predicated region
    $region102: #{tpu_custom_call.1} parent=1 // pred_check
      _
    $region103: #{tpu_custom_call.1} parent=1 // pred_check_branch
      %888 = sbr.rel (0) target = $region105
    $region104: #{tpu_custom_call.1} parent=1 // pred_region
      %890 = dma.done [#allocation4], 256
    $region105: #{tpu_custom_call.1} parent=1 // pred_fallthru
      _
    %891 = vsyncpa [#allocation3], 1
    %892 = vsyncpa [#allocation6], 1
    %893 = vsyncpa [#allocation9], 1
    %894 = vsyncpa [#allocation12], 1
    %895 = vsyncpa [#allocation15], 1
    %896 = vsyncpa [#allocation4], 1

// kernel: tpu_custom_call.1
$region0: #{tpu_custom_call.1}
  #allocation0 [shape = 'u32[]', space=smem, size = 0x4, offset = 0x4, fixed_abs, tag = 'smem constant byte address 0x4 - core index']
  #allocation1 [shape = 'u32[72,128]{1,0:T(1,128)}', space=vmem, size = 0x9000, scoped, tag = 'internal scratch']
  %s0 = inlined_call_operand.hbm [shape: f32[8,8], index: 0, kind: input, shape index: {}]
  %s1 = inlined_call_operand.hbm [shape: f32[8,512], index: 1, kind: input, shape index: {}]
  %s2 = inlined_call_operand.hbm [shape: f32[1,512], index: 2, kind: input, shape index: {}]
  %s3 = inlined_call_operand.hbm [shape: f32[512,256], index: 3, kind: input, shape index: {}]
  %s4 = inlined_call_operand.vmem [shape: f32[1,256], index: 4, kind: input, shape index: {}]
  %s5 = inlined_call_operand.hbm [shape: f32[256,128], index: 5, kind: input, shape index: {}]
  %s6 = inlined_call_operand.vmem [shape: f32[1,128], index: 6, kind: input, shape index: {}]
  %s7 = inlined_call_operand.hbm [shape: f32[128,128], index: 7, kind: input, shape index: {}]
  %s8 = inlined_call_operand.vmem [shape: f32[1,128], index: 8, kind: input, shape index: {}]
  %s9 = inlined_call_operand.hbm [shape: f32[128,128], index: 9, kind: input, shape index: {}]
  %s10 = inlined_call_operand.vmem [shape: f32[1,128], index: 10, kind: input, shape index: {}]
  %s11 = inlined_call_operand.hbm [shape: f32[128,128], index: 11, kind: input, shape index: {}]
  %s12 = inlined_call_operand.vmem [shape: f32[1,128], index: 12, kind: input, shape index: {}]
  %s13 = inlined_call_operand.hbm [shape: f32[128,256], index: 13, kind: input, shape index: {}]
  %s14 = inlined_call_operand.vmem [shape: f32[1,256], index: 14, kind: input, shape index: {}]
  %s15 = inlined_call_operand.hbm [shape: f32[8,256], index: 15, kind: output, shape index: {}]
  %s16 = sld [smem:[#allocation0]]
  $region106: #{tpu_custom_call.1} parent=0
    _
  %s18 = ssub.s32 1, %s16
  %s19 = scalar_select 0, %s18, %s16
  $region1: #{tpu_custom_call.1} parent=0
    #allocation2 [shape = 'u8[4096]{0}', space=vmem, size = 0x1000, scoped, tag = 'input window, operand 0, single buffered']
    #allocation3 [shape = 's32[1]{0}', space=sflag, size = 0x4, scoped, tag = 'scoped memory for tpu_custom_call.1']
    #allocation4 [shape = 's32[1]{0}', space=sflag, size = 0x4, scoped, tag = 'scoped memory for tpu_custom_call.1']
    #allocation5 [shape = 'u8[16384]{0}', space=vmem, size = 0x4000, scoped, tag = 'input window, operand 1, single buffered']
    #allocation6 [shape = 's32[1]{0}', space=sflag, size = 0x4, scoped, tag = 'scoped memory for tpu_custom_call.1']
    #allocation7 [shape = 'u8[2048]{0}', space=vmem, size = 0x800, scoped, tag = 'input window, operand 2, single buffered']
    #allocation8 [shape = 'u8[524288]{0}', space=vmem, size = 0x80000, scoped, tag = 'input window, operand 3, single buffered']
    #allocation9 [shape = 's32[1]{0}', space=sflag, size = 0x4, scoped, tag = 'scoped memory for tpu_custom_call.1']
    #allocation10 [shape = 'u8[131072]{0}', space=vmem, size = 0x20000, scoped, tag = 'input window, operand 5, single buffered']
    #allocation11 [shape = 'u8[65536]{0}', space=vmem, size = 0x10000, scoped, tag = 'input window, operand 7, single buffered']
    #allocation12 [shape = 's32[1]{0}', space=sflag, size = 0x4, scoped, tag = 'scoped memory for tpu_custom_call.1']
    #allocation13 [shape = 'u8[65536]{0}', space=vmem, size = 0x10000, scoped, tag = 'input window, operand 9, single buffered']
    #allocation14 [shape = 'u8[65536]{0}', space=vmem, size = 0x10000, scoped, tag = 'input window, operand 11, single buffered']
    #allocation15 [shape = 's32[1]{0}', space=sflag, size = 0x4, scoped, tag = 'scoped memory for tpu_custom_call.1']
    #allocation16 [shape = 'u8[131072]{0}', space=vmem, size = 0x20000, scoped, tag = 'input window, operand 13, single buffered']
    #allocation17 [shape = 'u8[8192]{0}', space=vmem, size = 0x2000, scoped, tag = 'output window, operand 0, single buffered']
    %20 = vsyncpa [#allocation3], 0
    %21 = vsyncpa [#allocation6], 0
    %22 = vsyncpa [#allocation9], 0
    %23 = vsyncpa [#allocation12], 0
    %24 = vsyncpa [#allocation15], 0
    %25 = vsyncpa [#allocation4], 0
    // Predicated region
    $region2: #{tpu_custom_call.1} parent=1 // pred_check
      _
    $region3: #{tpu_custom_call.1} parent=1 // pred_check_branch
      %27 = sbr.rel (0) target = $region5
    $region4: #{tpu_custom_call.1} parent=1 // pred_region
      %29 = vsyncadd [#allocation3], 0
      %s31 = sshll.u32 %s0, 4
      %s32 = int_to_ptr.hbm [resolvable:$true] %s31
      %s33 = sshll.u32 [#allocation2], 4
      %s34 = int_to_ptr.vmem [resolvable:$true] %s33
      %36 = dma.hbm_to_vmem [thread:$0]  %s32, 128, %s34, [#allocation3]
    $region5: #{tpu_custom_call.1} parent=1 // pred_fallthru
      _
    // Predicated region
    $region6: #{tpu_custom_call.1} parent=1 // pred_check
      _
    $region7: #{tpu_custom_call.1} parent=1 // pred_check_branch
      %38 = sbr.rel (0) target = $region9
    $region8: #{tpu_custom_call.1} parent=1 // pred_region
      %40 = vsyncadd [#allocation6], 0
      %s42 = sshll.u32 %s1, 4
      %s43 = int_to_ptr.hbm [resolvable:$true] %s42
      %s44 = sshll.u32 [#allocation5], 4
      %s45 = int_to_ptr.vmem [resolvable:$true] %s44
      %47 = dma.hbm_to_vmem [thread:$0]  %s43, 512, %s45, [#allocation6]
    $region9: #{tpu_custom_call.1} parent=1 // pred_fallthru
      _
    // Predicated region
    $region10: #{tpu_custom_call.1} parent=1 // pred_check
      _
    $region11: #{tpu_custom_call.1} parent=1 // pred_check_branch
      %49 = sbr.rel (0) target = $region13
    $region12: #{tpu_custom_call.1} parent=1 // pred_region
      %51 = vsyncadd [#allocation6], 0
      %s53 = sshll.u32 %s2, 4
      %s54 = int_to_ptr.hbm [resolvable:$true] %s53
      %s55 = sshll.u32 [#allocation7], 4
      %s56 = int_to_ptr.vmem [resolvable:$true] %s55
      %58 = dma.hbm_to_vmem [thread:$0]  %s54, 64, %s56, [#allocation6]
    $region13: #{tpu_custom_call.1} parent=1 // pred_fallthru
      _
    // Predicated region
    $region14: #{tpu_custom_call.1} parent=1 // pred_check
      _
    $region15: #{tpu_custom_call.1} parent=1 // pred_check_branch
      %60 = sbr.rel (0) target = $region17
    $region16: #{tpu_custom_call.1} parent=1 // pred_region
      %62 = vsyncadd [#allocation9], 0
      %s63 = sshll.u32 %s3, 4
      %s64 = int_to_ptr.hbm [resolvable:$true] %s63
      %s65 = sshll.u32 [#allocation8], 4
      %s66 = int_to_ptr.vmem [resolvable:$true] %s65
      %71 = dma.hbm_to_vmem [thread:$0]  %s64, 16384, %s66, [#allocation9], 256, 256, 16
    $region17: #{tpu_custom_call.1} parent=1 // pred_fallthru
      _
    // Predicated region
    $region18: #{tpu_custom_call.1} parent=1 // pred_check
      _
    $region19: #{tpu_custom_call.1} parent=1 // pred_check_branch
      %73 = sbr.rel (0) target = $region21
    $region20: #{tpu_custom_call.1} parent=1 // pred_region
      _
    $region21: #{tpu_custom_call.1} parent=1 // pred_fallthru
      _
    // Predicated region
    $region22: #{tpu_custom_call.1} parent=1 // pred_check
      _
    $region23: #{tpu_custom_call.1} parent=1 // pred_check_branch
      %75 = sbr.rel (0) target = $region25
    $region24: #{tpu_custom_call.1} parent=1 // pred_region
      %77 = vsyncadd [#allocation9], 0
      %s78 = sshll.u32 %s5, 4
      %s79 = int_to_ptr.hbm [resolvable:$true] %s78
      %s80 = sshll.u32 [#allocation10], 4
      %s81 = int_to_ptr.vmem [resolvable:$true] %s80
      %86 = dma.hbm_to_vmem [thread:$0]  %s79, 4096, %s81, [#allocation9], 128, 128, 8
    $region25: #{tpu_custom_call.1} parent=1 // pred_fallthru
      _
    // Predicated region
    $region26: #{tpu_custom_call.1} parent=1 // pred_check
      _
    $region27: #{tpu_custom_call.1} parent=1 // pred_check_branch
      %88 = sbr.rel (0) target = $region29
    $region28: #{tpu_custom_call.1} parent=1 // pred_region
      _
    $region29: #{tpu_custom_call.1} parent=1 // pred_fallthru
      _
    // Predicated region
    $region30: #{tpu_custom_call.1} parent=1 // pred_check
      _
    $region31: #{tpu_custom_call.1} parent=1 // pred_check_branch
      %90 = sbr.rel (0) target = $region33
    $region32: #{tpu_custom_call.1} parent=1 // pred_region
      %92 = vsyncadd [#allocation12], 0
      %s93 = sshll.u32 %s7, 4
      %s94 = int_to_ptr.hbm [resolvable:$true] %s93
      %s95 = sshll.u32 [#allocation11], 4
      %s96 = int_to_ptr.vmem [resolvable:$true] %s95
      %101 = dma.hbm_to_vmem [thread:$0]  %s94, 2048, %s96, [#allocation12], 128, 128, 8
    $region33: #{tpu_custom_call.1} parent=1 // pred_fallthru
      _
    // Predicated region
    $region34: #{tpu_custom_call.1} parent=1 // pred_check
      _
    $region35: #{tpu_custom_call.1} parent=1 // pred_check_branch
      %103 = sbr.rel (0) target = $region37
    $region36: #{tpu_custom_call.1} parent=1 // pred_region
      _
    $region37: #{tpu_custom_call.1} parent=1 // pred_fallthru
      _
    // Predicated region
    $region38: #{tpu_custom_call.1} parent=1 // pred_check
      _
    $region39: #{tpu_custom_call.1} parent=1 // pred_check_branch
      %105 = sbr.rel (0) target = $region41
    $region40: #{tpu_custom_call.1} parent=1 // pred_region
      %107 = vsyncadd [#allocation12], 0
      %s108 = sshll.u32 %s9, 4
      %s109 = int_to_ptr.hbm [resolvable:$true] %s108
      %s110 = sshll.u32 [#allocation13], 4
      %s111 = int_to_ptr.vmem [resolvable:$true] %s110
      %116 = dma.hbm_to_vmem [thread:$0]  %s109, 2048, %s111, [#allocation12], 128, 128, 8
    $region41: #{tpu_custom_call.1} parent=1 // pred_fallthru
      _
    // Predicated region
    $region42: #{tpu_custom_call.1} parent=1 // pred_check
      _
    $region43: #{tpu_custom_call.1} parent=1 // pred_check_branch
      %118 = sbr.rel (0) target = $region45
    $region44: #{tpu_custom_call.1} parent=1 // pred_region
      _
    $region45: #{tpu_custom_call.1} parent=1 // pred_fallthru
      _
    // Predicated region
    $region46: #{tpu_custom_call.1} parent=1 // pred_check
      _
    $region47: #{tpu_custom_call.1} parent=1 // pred_check_branch
      %120 = sbr.rel (0) target = $region49
    $region48: #{tpu_custom_call.1} parent=1 // pred_region
      %122 = vsyncadd [#allocation15], 0
      %s123 = sshll.u32 %s11, 4
      %s124 = int_to_ptr.hbm [resolvable:$true] %s123
      %s125 = sshll.u32 [#allocation14], 4
      %s126 = int_to_ptr.vmem [resolvable:$true] %s125
      %131 = dma.hbm_to_vmem [thread:$0]  %s124, 2048, %s126, [#allocation15], 128, 128, 8
    $region49: #{tpu_custom_call.1} parent=1 // pred_fallthru
      _
    // Predicated region
    $region50: #{tpu_custom_call.1} parent=1 // pred_check
      _
    $region51: #{tpu_custom_call.1} parent=1 // pred_check_branch
      %133 = sbr.rel (0) target = $region53
    $region52: #{tpu_custom_call.1} parent=1 // pred_region
      _
    $region53: #{tpu_custom_call.1} parent=1 // pred_fallthru
      _
    // Predicated region
    $region54: #{tpu_custom_call.1} parent=1 // pred_check
      _
    $region55: #{tpu_custom_call.1} parent=1 // pred_check_branch
      %135 = sbr.rel (0) target = $region57
    $region56: #{tpu_custom_call.1} parent=1 // pred_region
      %137 = vsyncadd [#allocation15], 0
      %s138 = sshll.u32 %s13, 4
      %s139 = int_to_ptr.hbm [resolvable:$true] %s138
      %s140 = sshll.u32 [#allocation16], 4
      %s141 = int_to_ptr.vmem [resolvable:$true] %s140
      %146 = dma.hbm_to_vmem [thread:$0]  %s139, 4096, %s141, [#allocation15], 256, 256, 16
    $region57: #{tpu_custom_call.1} parent=1 // pred_fallthru
      _
    // Predicated region
    $region58: #{tpu_custom_call.1} parent=1 // pred_check
      _
    $region59: #{tpu_custom_call.1} parent=1 // pred_check_branch
      %148 = sbr.rel (0) target = $region61
    $region60: #{tpu_custom_call.1} parent=1 // pred_region
      _
    $region61: #{tpu_custom_call.1} parent=1 // pred_fallthru
      _
    // Predicated region
    $region62: #{tpu_custom_call.1} parent=1 // pred_check
      _
    $region63: #{tpu_custom_call.1} parent=1 // pred_check_branch
      %150 = sbr.rel (0) target = $region65
    $region64: #{tpu_custom_call.1} parent=1 // pred_region
      %152 = dma.done [#allocation3], 128
    $region65: #{tpu_custom_call.1} parent=1 // pred_fallthru
      _
    // Predicated region
    $region66: #{tpu_custom_call.1} parent=1 // pred_check
      _
    $region67: #{tpu_custom_call.1} parent=1 // pred_check_branch
      %154 = sbr.rel (0) target = $region69
    $region68: #{tpu_custom_call.1} parent=1 // pred_region
      %156 = dma.done [#allocation6], 512
    $region69: #{tpu_custom_call.1} parent=1 // pred_fallthru
      _
    // Predicated region
    $region70: #{tpu_custom_call.1} parent=1 // pred_check
      _
    $region71: #{tpu_custom_call.1} parent=1 // pred_check_branch
      %158 = sbr.rel (0) target = $region73
    $region72: #{tpu_custom_call.1} parent=1 // pred_region
      %160 = dma.done [#allocation6], 64
    $region73: #{tpu_custom_call.1} parent=1 // pred_fallthru
      _
    // Predicated region
    $region74: #{tpu_custom_call.1} parent=1 // pred_check
      _
    $region75: #{tpu_custom_call.1} parent=1 // pred_check_branch
      %162 = sbr.rel (0) target = $region77
    $region76: #{tpu_custom_call.1} parent=1 // pred_region
      %164 = dma.done [#allocation9], 16384
    $region77: #{tpu_custom_call.1} parent=1 // pred_fallthru
      _
    // Predicated region
    $region78: #{tpu_custom_call.1} parent=1 // pred_check
      _
    $region79: #{tpu_custom_call.1} parent=1 // pred_check_branch
      %166 = sbr.rel (0) target = $region81
    $region80: #{tpu_custom_call.1} parent=1 // pred_region
      %168 = dma.done [#allocation9], 4096
    $region81: #{tpu_custom_call.1} parent=1 // pred_fallthru
      _
    // Predicated region
    $region82: #{tpu_custom_call.1} parent=1 // pred_check
      _
    $region83: #{tpu_custom_call.1} parent=1 // pred_check_branch
      %170 = sbr.rel (0) target = $region85
    $region84: #{tpu_custom_call.1} parent=1 // pred_region
      %172 = dma.done [#allocation12], 2048
    $region85: #{tpu_custom_call.1} parent=1 // pred_fallthru
      _
    // Predicated region
    $region86: #{tpu_custom_call.1} parent=1 // pred_check
      _
    $region87: #{tpu_custom_call.1} parent=1 // pred_check_branch
      %174 = sbr.rel (0) target = $region89
    $region88: #{tpu_custom_call.1} parent=1 // pred_region
      %176 = dma.done [#allocation12], 2048
    $region89: #{tpu_custom_call.1} parent=1 // pred_fallthru
      _
    // Predicated region
    $region90: #{tpu_custom_call.1} parent=1 // pred_check
      _
    $region91: #{tpu_custom_call.1} parent=1 // pred_check_branch
      %178 = sbr.rel (0) target = $region93
    $region92: #{tpu_custom_call.1} parent=1 // pred_region
      %180 = dma.done [#allocation15], 2048
    $region93: #{tpu_custom_call.1} parent=1 // pred_fallthru
      _
    // Predicated region
    $region94: #{tpu_custom_call.1} parent=1 // pred_check
      _
    $region95: #{tpu_custom_call.1} parent=1 // pred_check_branch
      %182 = sbr.rel (0) target = $region97
    $region96: #{tpu_custom_call.1} parent=1 // pred_region
      %184 = dma.done [#allocation15], 4096
    $region97: #{tpu_custom_call.1} parent=1 // pred_fallthru
      _
    %v185 = vld [vmem:[#allocation2] sm:$0xff]
    %v186 = vld [vmem:[#allocation5] sm:$0xff]
    %v187 = vld [vmem:[#allocation5 + $0x8] sm:$0xff]
    %v188 = vld [vmem:[#allocation5 + $0x10] sm:$0xff]
    %v189 = vld [vmem:[#allocation5 + $0x18] sm:$0xff]
    %v190 = vld [vmem:[#allocation7] sm:$0xf]
    %v192 = vperm.slane %v190, 0
    %v193 = vperm.slane %v190, 1
    %v194 = vperm.slane %v190, 2
    %v195 = vperm.slane %v190, 3
    %vm200 = vcmask 64512
    %v202 = vsel %vm200, %v185, 0
    %204 = vmatpush.msra.mxu0 0.0
    %205 = vmatpush.msra.mxu0 0.0
    %206 = vmatpush.msra.mxu0 0.0
    %207 = vmatpush.msra.mxu0 0.0
    %208 = vmatpush.msra.mxu0 0.0
    %209 = vmatpush.msra.mxu0 0.0
    %210 = vmatpush.msra.mxu0 0.0
    %211 = vmatpush.msra.mxu0 0.0
    %212 = vmatpush.msra.mxu0 0.0
    %213 = vmatpush.msra.mxu0 0.0
    %214 = vmatpush.msra.mxu0 0.0
    %215 = vmatpush.msra.mxu0 0.0
    %216 = vmatpush.msra.mxu0 0.0
    %217 = vmatpush.msra.mxu0 0.0
    %218 = vmatpush.msra.mxu0 0.0
    %219 = vmatpush.msra.mxu0 %v186
    %220 = vmatmul.f32.gmra.mxu0 %v202
    %v221 = vpop.f32.mrf.mxu0
    %v222 = vadd.f32 %v192, %v221
    %223 = vdwg.mxu0
    %224 = vmatpush.msra.mxu0 0.0
    %225 = vmatpush.msra.mxu0 0.0
    %226 = vmatpush.msra.mxu0 0.0
    %227 = vmatpush.msra.mxu0 0.0
    %228 = vmatpush.msra.mxu0 0.0
    %229 = vmatpush.msra.mxu0 0.0
    %230 = vmatpush.msra.mxu0 0.0
    %231 = vmatpush.msra.mxu0 0.0
    %232 = vmatpush.msra.mxu0 0.0
    %233 = vmatpush.msra.mxu0 0.0
    %234 = vmatpush.msra.mxu0 0.0
    %235 = vmatpush.msra.mxu0 0.0
    %236 = vmatpush.msra.mxu0 0.0
    %237 = vmatpush.msra.mxu0 0.0
    %238 = vmatpush.msra.mxu0 0.0
    %239 = vmatpush.msra.mxu0 %v187
    %240 = vmatmul.f32.gmra.mxu0 %v202
    %v241 = vpop.f32.mrf.mxu0
    %v242 = vadd.f32 %v193, %v241
    %243 = vdwg.mxu0
    %244 = vmatpush.msra.mxu0 0.0
    %245 = vmatpush.msra.mxu0 0.0
    %246 = vmatpush.msra.mxu0 0.0
    %247 = vmatpush.msra.mxu0 0.0
    %248 = vmatpush.msra.mxu0 0.0
    %249 = vmatpush.msra.mxu0 0.0
    %250 = vmatpush.msra.mxu0 0.0
    %251 = vmatpush.msra.mxu0 0.0
    %252 = vmatpush.msra.mxu0 0.0
    %253 = vmatpush.msra.mxu0 0.0
    %254 = vmatpush.msra.mxu0 0.0
    %255 = vmatpush.msra.mxu0 0.0
    %256 = vmatpush.msra.mxu0 0.0
    %257 = vmatpush.msra.mxu0 0.0
    %258 = vmatpush.msra.mxu0 0.0
    %259 = vmatpush.msra.mxu0 %v188
    %260 = vmatmul.f32.gmra.mxu0 %v202
    %v261 = vpop.f32.mrf.mxu0
    %v262 = vadd.f32 %v194, %v261
    %263 = vdwg.mxu0
    %264 = vmatpush.msra.mxu0 0.0
    %265 = vmatpush.msra.mxu0 0.0
    %266 = vmatpush.msra.mxu0 0.0
    %267 = vmatpush.msra.mxu0 0.0
    %268 = vmatpush.msra.mxu0 0.0
    %269 = vmatpush.msra.mxu0 0.0
    %270 = vmatpush.msra.mxu0 0.0
    %271 = vmatpush.msra.mxu0 0.0
    %272 = vmatpush.msra.mxu0 0.0
    %273 = vmatpush.msra.mxu0 0.0
    %274 = vmatpush.msra.mxu0 0.0
    %275 = vmatpush.msra.mxu0 0.0
    %276 = vmatpush.msra.mxu0 0.0
    %277 = vmatpush.msra.mxu0 0.0
    %278 = vmatpush.msra.mxu0 0.0
    %279 = vmatpush.msra.mxu0 %v189
    %280 = vmatmul.f32.gmra.mxu0 %v202
    %v281 = vpop.f32.mrf.mxu0
    %v282 = vadd.f32 %v195, %v281
    %283 = vdwg.mxu0
    %v284 = vmul.f32 %v222, 0.2
    %v285 = vmul.f32 %v242, 0.2
    %v286 = vmul.f32 %v262, 0.2
    %v287 = vmul.f32 %v282, 0.2
    %v288 = vmax.f32 %v222, %v284
    %v289 = vmax.f32 %v242, %v285
    %v290 = vmax.f32 %v262, %v286
    %v291 = vmax.f32 %v282, %v287
    %v292 = vld [vmem:[#allocation8] sm:$0xff]
    %v293 = vld [vmem:[#allocation8 + $0x8] sm:$0xff]
    %v294 = vld [vmem:[#allocation8 + $0x10] sm:$0xff]
    %v295 = vld [vmem:[#allocation8 + $0x18] sm:$0xff]
    %v296 = vld [vmem:[#allocation8 + $0x20] sm:$0xff]
    %v297 = vld [vmem:[#allocation8 + $0x28] sm:$0xff]
    %v298 = vld [vmem:[#allocation8 + $0x30] sm:$0xff]
    %v299 = vld [vmem:[#allocation8 + $0x38] sm:$0xff]
    %v300 = vld [vmem:[#allocation8 + $0x40] sm:$0xff]
    %v301 = vld [vmem:[#allocation8 + $0x48] sm:$0xff]
    %v302 = vld [vmem:[#allocation8 + $0x50] sm:$0xff]
    %v303 = vld [vmem:[#allocation8 + $0x58] sm:$0xff]
    %v304 = vld [vmem:[#allocation8 + $0x60] sm:$0xff]
    %v305 = vld [vmem:[#allocation8 + $0x68] sm:$0xff]
    %v306 = vld [vmem:[#allocation8 + $0x70] sm:$0xff]
    %v307 = vld [vmem:[#allocation8 + $0x78] sm:$0xff]
    %v308 = vld [vmem:[#allocation8 + $0x80] sm:$0xff]
    %v309 = vld [vmem:[#allocation8 + $0x88] sm:$0xff]
    %v310 = vld [vmem:[#allocation8 + $0x90] sm:$0xff]
    %v311 = vld [vmem:[#allocation8 + $0x98] sm:$0xff]
    %v312 = vld [vmem:[#allocation8 + $0xa0] sm:$0xff]
    %v313 = vld [vmem:[#allocation8 + $0xa8] sm:$0xff]
    %v314 = vld [vmem:[#allocation8 + $0xb0] sm:$0xff]
    %v315 = vld [vmem:[#allocation8 + $0xb8] sm:$0xff]
    %v316 = vld [vmem:[#allocation8 + $0xc0] sm:$0xff]
    %v317 = vld [vmem:[#allocation8 + $0xc8] sm:$0xff]
    %v318 = vld [vmem:[#allocation8 + $0xd0] sm:$0xff]
    %v319 = vld [vmem:[#allocation8 + $0xd8] sm:$0xff]
    %v320 = vld [vmem:[#allocation8 + $0xe0] sm:$0xff]
    %v321 = vld [vmem:[#allocation8 + $0xe8] sm:$0xff]
    %v322 = vld [vmem:[#allocation8 + $0xf0] sm:$0xff]
    %v323 = vld [vmem:[#allocation8 + $0xf8] sm:$0xff]
    %v324 = vld [vmem:[#allocation8 + $0x100] sm:$0xff]
    %v325 = vld [vmem:[#allocation8 + $0x108] sm:$0xff]
    %v326 = vld [vmem:[#allocation8 + $0x110] sm:$0xff]
    %v327 = vld [vmem:[#allocation8 + $0x118] sm:$0xff]
    %v328 = vld [vmem:[#allocation8 + $0x120] sm:$0xff]
    %v329 = vld [vmem:[#allocation8 + $0x128] sm:$0xff]
    %v330 = vld [vmem:[#allocation8 + $0x130] sm:$0xff]
    %v331 = vld [vmem:[#allocation8 + $0x138] sm:$0xff]
    %v332 = vld [vmem:[#allocation8 + $0x140] sm:$0xff]
    %v333 = vld [vmem:[#allocation8 + $0x148] sm:$0xff]
    %v334 = vld [vmem:[#allocation8 + $0x150] sm:$0xff]
    %v335 = vld [vmem:[#allocation8 + $0x158] sm:$0xff]
    %v336 = vld [vmem:[#allocation8 + $0x160] sm:$0xff]
    %v337 = vld [vmem:[#allocation8 + $0x168] sm:$0xff]
    %v338 = vld [vmem:[#allocation8 + $0x170] sm:$0xff]
    %v339 = vld [vmem:[#allocation8 + $0x178] sm:$0xff]
    %v340 = vld [vmem:[#allocation8 + $0x180] sm:$0xff]
    %v341 = vld [vmem:[#allocation8 + $0x188] sm:$0xff]
    %v342 = vld [vmem:[#allocation8 + $0x190] sm:$0xff]
    %v343 = vld [vmem:[#allocation8 + $0x198] sm:$0xff]
    %v344 = vld [vmem:[#allocation8 + $0x1a0] sm:$0xff]
    %v345 = vld [vmem:[#allocation8 + $0x1a8] sm:$0xff]
    %v346 = vld [vmem:[#allocation8 + $0x1b0] sm:$0xff]
    %v347 = vld [vmem:[#allocation8 + $0x1b8] sm:$0xff]
    %v348 = vld [vmem:[#allocation8 + $0x1c0] sm:$0xff]
    %v349 = vld [vmem:[#allocation8 + $0x1c8] sm:$0xff]
    %v350 = vld [vmem:[#allocation8 + $0x1d0] sm:$0xff]
    %v351 = vld [vmem:[#allocation8 + $0x1d8] sm:$0xff]
    %v352 = vld [vmem:[#allocation8 + $0x1e0] sm:$0xff]
    %v353 = vld [vmem:[#allocation8 + $0x1e8] sm:$0xff]
    %v354 = vld [vmem:[#allocation8 + $0x1f0] sm:$0xff]
    %v355 = vld [vmem:[#allocation8 + $0x1f8] sm:$0xff]
    %v356 = vld [vmem:[#allocation8 + $0x200] sm:$0xff]
    %v357 = vld [vmem:[#allocation8 + $0x208] sm:$0xff]
    %v358 = vld [vmem:[#allocation8 + $0x210] sm:$0xff]
    %v359 = vld [vmem:[#allocation8 + $0x218] sm:$0xff]
    %v360 = vld [vmem:[#allocation8 + $0x220] sm:$0xff]
    %v361 = vld [vmem:[#allocation8 + $0x228] sm:$0xff]
    %v362 = vld [vmem:[#allocation8 + $0x230] sm:$0xff]
    %v363 = vld [vmem:[#allocation8 + $0x238] sm:$0xff]
    %v364 = vld [vmem:[#allocation8 + $0x240] sm:$0xff]
    %v365 = vld [vmem:[#allocation8 + $0x248] sm:$0xff]
    %v366 = vld [vmem:[#allocation8 + $0x250] sm:$0xff]
    %v367 = vld [vmem:[#allocation8 + $0x258] sm:$0xff]
    %v368 = vld [vmem:[#allocation8 + $0x260] sm:$0xff]
    %v369 = vld [vmem:[#allocation8 + $0x268] sm:$0xff]
    %v370 = vld [vmem:[#allocation8 + $0x270] sm:$0xff]
    %v371 = vld [vmem:[#allocation8 + $0x278] sm:$0xff]
    %v372 = vld [vmem:[#allocation8 + $0x280] sm:$0xff]
    %v373 = vld [vmem:[#allocation8 + $0x288] sm:$0xff]
    %v374 = vld [vmem:[#allocation8 + $0x290] sm:$0xff]
    %v375 = vld [vmem:[#allocation8 + $0x298] sm:$0xff]
    %v376 = vld [vmem:[#allocation8 + $0x2a0] sm:$0xff]
    %v377 = vld [vmem:[#allocation8 + $0x2a8] sm:$0xff]
    %v378 = vld [vmem:[#allocation8 + $0x2b0] sm:$0xff]
    %v379 = vld [vmem:[#allocation8 + $0x2b8] sm:$0xff]
    %v380 = vld [vmem:[#allocation8 + $0x2c0] sm:$0xff]
    %v381 = vld [vmem:[#allocation8 + $0x2c8] sm:$0xff]
    %v382 = vld [vmem:[#allocation8 + $0x2d0] sm:$0xff]
    %v383 = vld [vmem:[#allocation8 + $0x2d8] sm:$0xff]
    %v384 = vld [vmem:[#allocation8 + $0x2e0] sm:$0xff]
    %v385 = vld [vmem:[#allocation8 + $0x2e8] sm:$0xff]
    %v386 = vld [vmem:[#allocation8 + $0x2f0] sm:$0xff]
    %v387 = vld [vmem:[#allocation8 + $0x2f8] sm:$0xff]
    %v388 = vld [vmem:[#allocation8 + $0x300] sm:$0xff]
    %v389 = vld [vmem:[#allocation8 + $0x308] sm:$0xff]
    %v390 = vld [vmem:[#allocation8 + $0x310] sm:$0xff]
    %v391 = vld [vmem:[#allocation8 + $0x318] sm:$0xff]
    %v392 = vld [vmem:[#allocation8 + $0x320] sm:$0xff]
    %v393 = vld [vmem:[#allocation8 + $0x328] sm:$0xff]
    %v394 = vld [vmem:[#allocation8 + $0x330] sm:$0xff]
    %v395 = vld [vmem:[#allocation8 + $0x338] sm:$0xff]
    %v396 = vld [vmem:[#allocation8 + $0x340] sm:$0xff]
    %v397 = vld [vmem:[#allocation8 + $0x348] sm:$0xff]
    %v398 = vld [vmem:[#allocation8 + $0x350] sm:$0xff]
    %v399 = vld [vmem:[#allocation8 + $0x358] sm:$0xff]
    %v400 = vld [vmem:[#allocation8 + $0x360] sm:$0xff]
    %v401 = vld [vmem:[#allocation8 + $0x368] sm:$0xff]
    %v402 = vld [vmem:[#allocation8 + $0x370] sm:$0xff]
    %v403 = vld [vmem:[#allocation8 + $0x378] sm:$0xff]
    %v404 = vld [vmem:[#allocation8 + $0x380] sm:$0xff]
    %v405 = vld [vmem:[#allocation8 + $0x388] sm:$0xff]
    %v406 = vld [vmem:[#allocation8 + $0x390] sm:$0xff]
    %v407 = vld [vmem:[#allocation8 + $0x398] sm:$0xff]
    %v408 = vld [vmem:[#allocation8 + $0x3a0] sm:$0xff]
    %v409 = vld [vmem:[#allocation8 + $0x3a8] sm:$0xff]
    %v410 = vld [vmem:[#allocation8 + $0x3b0] sm:$0xff]
    %v411 = vld [vmem:[#allocation8 + $0x3b8] sm:$0xff]
    %v412 = vld [vmem:[#allocation8 + $0x3c0] sm:$0xff]
    %v413 = vld [vmem:[#allocation8 + $0x3c8] sm:$0xff]
    %v414 = vld [vmem:[#allocation8 + $0x3d0] sm:$0xff]
    %v415 = vld [vmem:[#allocation8 + $0x3d8] sm:$0xff]
    %v416 = vld [vmem:[#allocation8 + $0x3e0] sm:$0xff]
    %v417 = vld [vmem:[#allocation8 + $0x3e8] sm:$0xff]
    %v418 = vld [vmem:[#allocation8 + $0x3f0] sm:$0xff]
    %v419 = vld [vmem:[#allocation8 + $0x3f8] sm:$0xff]
    %v420 = vld [vmem:[%s4] sm:$0x3]
    %v422 = vperm.slane %v420, 0
    %v423 = vperm.slane %v420, 1
    %426 = vmatpush.msra.mxu0 %v322
    %427 = vmatpush.msra.mxu0 %v320
    %428 = vmatpush.msra.mxu0 %v318
    %429 = vmatpush.msra.mxu0 %v316
    %430 = vmatpush.msra.mxu0 %v314
    %431 = vmatpush.msra.mxu0 %v312
    %432 = vmatpush.msra.mxu0 %v310
    %433 = vmatpush.msra.mxu0 %v308
    %434 = vmatpush.msra.mxu0 %v306
    %435 = vmatpush.msra.mxu0 %v304
    %436 = vmatpush.msra.mxu0 %v302
    %437 = vmatpush.msra.mxu0 %v300
    %438 = vmatpush.msra.mxu0 %v298
    %439 = vmatpush.msra.mxu0 %v296
    %440 = vmatpush.msra.mxu0 %v294
    %441 = vmatpush.msra.mxu0 %v292
    %442 = vmatmul.f32.gmra.mxu0 %v288
    %v443 = vpop.f32.mrf.mxu0
    %v444 = vadd.f32 %v422, %v443
    %445 = vdwg.mxu0
    %446 = vmatpush.msra.mxu0 %v354
    %447 = vmatpush.msra.mxu0 %v352
    %448 = vmatpush.msra.mxu0 %v350
    %449 = vmatpush.msra.mxu0 %v348
    %450 = vmatpush.msra.mxu0 %v346
    %451 = vmatpush.msra.mxu0 %v344
    %452 = vmatpush.msra.mxu0 %v342
    %453 = vmatpush.msra.mxu0 %v340
    %454 = vmatpush.msra.mxu0 %v338
    %455 = vmatpush.msra.mxu0 %v336
    %456 = vmatpush.msra.mxu0 %v334
    %457 = vmatpush.msra.mxu0 %v332
    %458 = vmatpush.msra.mxu0 %v330
    %459 = vmatpush.msra.mxu0 %v328
    %460 = vmatpush.msra.mxu0 %v326
    %461 = vmatpush.msra.mxu0 %v324
    %462 = vmatmul.f32.gmra.mxu0 %v289
    %v463 = vpop.f32.mrf.mxu0
    %v464 = vadd.f32 %v444, %v463
    %465 = vdwg.mxu0
    %466 = vmatpush.msra.mxu0 %v386
    %467 = vmatpush.msra.mxu0 %v384
    %468 = vmatpush.msra.mxu0 %v382
    %469 = vmatpush.msra.mxu0 %v380
    %470 = vmatpush.msra.mxu0 %v378
    %471 = vmatpush.msra.mxu0 %v376
    %472 = vmatpush.msra.mxu0 %v374
    %473 = vmatpush.msra.mxu0 %v372
    %474 = vmatpush.msra.mxu0 %v370
    %475 = vmatpush.msra.mxu0 %v368
    %476 = vmatpush.msra.mxu0 %v366
    %477 = vmatpush.msra.mxu0 %v364
    %478 = vmatpush.msra.mxu0 %v362
    %479 = vmatpush.msra.mxu0 %v360
    %480 = vmatpush.msra.mxu0 %v358
    %481 = vmatpush.msra.mxu0 %v356
    %482 = vmatmul.f32.gmra.mxu0 %v290
    %v483 = vpop.f32.mrf.mxu0
    %v484 = vadd.f32 %v464, %v483
    %485 = vdwg.mxu0
    %486 = vmatpush.msra.mxu0 %v418
    %487 = vmatpush.msra.mxu0 %v416
    %488 = vmatpush.msra.mxu0 %v414
    %489 = vmatpush.msra.mxu0 %v412
    %490 = vmatpush.msra.mxu0 %v410
    %491 = vmatpush.msra.mxu0 %v408
    %492 = vmatpush.msra.mxu0 %v406
    %493 = vmatpush.msra.mxu0 %v404
    %494 = vmatpush.msra.mxu0 %v402
    %495 = vmatpush.msra.mxu0 %v400
    %496 = vmatpush.msra.mxu0 %v398
    %497 = vmatpush.msra.mxu0 %v396
    %498 = vmatpush.msra.mxu0 %v394
    %499 = vmatpush.msra.mxu0 %v392
    %500 = vmatpush.msra.mxu0 %v390
    %501 = vmatpush.msra.mxu0 %v388
    %502 = vmatmul.f32.gmra.mxu0 %v291
    %v503 = vpop.f32.mrf.mxu0
    %v504 = vadd.f32 %v484, %v503
    %505 = vdwg.mxu0
    %506 = vmatpush.msra.mxu0 %v323
    %507 = vmatpush.msra.mxu0 %v321
    %508 = vmatpush.msra.mxu0 %v319
    %509 = vmatpush.msra.mxu0 %v317
    %510 = vmatpush.msra.mxu0 %v315
    %511 = vmatpush.msra.mxu0 %v313
    %512 = vmatpush.msra.mxu0 %v311
    %513 = vmatpush.msra.mxu0 %v309
    %514 = vmatpush.msra.mxu0 %v307
    %515 = vmatpush.msra.mxu0 %v305
    %516 = vmatpush.msra.mxu0 %v303
    %517 = vmatpush.msra.mxu0 %v301
    %518 = vmatpush.msra.mxu0 %v299
    %519 = vmatpush.msra.mxu0 %v297
    %520 = vmatpush.msra.mxu0 %v295
    %521 = vmatpush.msra.mxu0 %v293
    %522 = vmatmul.f32.gmra.mxu0 %v288
    %v523 = vpop.f32.mrf.mxu0
    %v524 = vadd.f32 %v423, %v523
    %525 = vdwg.mxu0
    %526 = vmatpush.msra.mxu0 %v355
    %527 = vmatpush.msra.mxu0 %v353
    %528 = vmatpush.msra.mxu0 %v351
    %529 = vmatpush.msra.mxu0 %v349
    %530 = vmatpush.msra.mxu0 %v347
    %531 = vmatpush.msra.mxu0 %v345
    %532 = vmatpush.msra.mxu0 %v343
    %533 = vmatpush.msra.mxu0 %v341
    %534 = vmatpush.msra.mxu0 %v339
    %535 = vmatpush.msra.mxu0 %v337
    %536 = vmatpush.msra.mxu0 %v335
    %537 = vmatpush.msra.mxu0 %v333
    %538 = vmatpush.msra.mxu0 %v331
    %539 = vmatpush.msra.mxu0 %v329
    %540 = vmatpush.msra.mxu0 %v327
    %541 = vmatpush.msra.mxu0 %v325
    %542 = vmatmul.f32.gmra.mxu0 %v289
    %v543 = vpop.f32.mrf.mxu0
    %v544 = vadd.f32 %v524, %v543
    %545 = vdwg.mxu0
    %546 = vmatpush.msra.mxu0 %v387
    %547 = vmatpush.msra.mxu0 %v385
    %548 = vmatpush.msra.mxu0 %v383
    %549 = vmatpush.msra.mxu0 %v381
    %550 = vmatpush.msra.mxu0 %v379
    %551 = vmatpush.msra.mxu0 %v377
    %552 = vmatpush.msra.mxu0 %v375
    %553 = vmatpush.msra.mxu0 %v373
    %554 = vmatpush.msra.mxu0 %v371
    %555 = vmatpush.msra.mxu0 %v369
    %556 = vmatpush.msra.mxu0 %v367
    %557 = vmatpush.msra.mxu0 %v365
    %558 = vmatpush.msra.mxu0 %v363
    %559 = vmatpush.msra.mxu0 %v361
    %560 = vmatpush.msra.mxu0 %v359
    %561 = vmatpush.msra.mxu0 %v357
    %562 = vmatmul.f32.gmra.mxu0 %v290
    %v563 = vpop.f32.mrf.mxu0
    %v564 = vadd.f32 %v544, %v563
    %565 = vdwg.mxu0
    %566 = vmatpush.msra.mxu0 %v419
    %567 = vmatpush.msra.mxu0 %v417
    %568 = vmatpush.msra.mxu0 %v415
    %569 = vmatpush.msra.mxu0 %v413
    %570 = vmatpush.msra.mxu0 %v411
    %571 = vmatpush.msra.mxu0 %v409
    %572 = vmatpush.msra.mxu0 %v407
    %573 = vmatpush.msra.mxu0 %v405
    %574 = vmatpush.msra.mxu0 %v403
    %575 = vmatpush.msra.mxu0 %v401
    %576 = vmatpush.msra.mxu0 %v399
    %577 = vmatpush.msra.mxu0 %v397
    %578 = vmatpush.msra.mxu0 %v395
    %579 = vmatpush.msra.mxu0 %v393
    %580 = vmatpush.msra.mxu0 %v391
    %581 = vmatpush.msra.mxu0 %v389
    %582 = vmatmul.f32.gmra.mxu0 %v291
    %v583 = vpop.f32.mrf.mxu0
    %v584 = vadd.f32 %v564, %v583
    %585 = vdwg.mxu0
    %v586 = vmul.f32 %v504, 0.2
    %v587 = vmul.f32 %v584, 0.2
    %v588 = vmax.f32 %v504, %v586
    %v589 = vmax.f32 %v584, %v587
    %v590 = vld [vmem:[#allocation10] sm:$0xff]
    %v591 = vld [vmem:[#allocation10 + $0x8] sm:$0xff]
    %v592 = vld [vmem:[#allocation10 + $0x10] sm:$0xff]
    %v593 = vld [vmem:[#allocation10 + $0x18] sm:$0xff]
    %v594 = vld [vmem:[#allocation10 + $0x20] sm:$0xff]
    %v595 = vld [vmem:[#allocation10 + $0x28] sm:$0xff]
    %v596 = vld [vmem:[#allocation10 + $0x30] sm:$0xff]
    %v597 = vld [vmem:[#allocation10 + $0x38] sm:$0xff]
    %v598 = vld [vmem:[#allocation10 + $0x40] sm:$0xff]
    %v599 = vld [vmem:[#allocation10 + $0x48] sm:$0xff]
    %v600 = vld [vmem:[#allocation10 + $0x50] sm:$0xff]
    %v601 = vld [vmem:[#allocation10 + $0x58] sm:$0xff]
    %v602 = vld [vmem:[#allocation10 + $0x60] sm:$0xff]
    %v603 = vld [vmem:[#allocation10 + $0x68] sm:$0xff]
    %v604 = vld [vmem:[#allocation10 + $0x70] sm:$0xff]
    %v605 = vld [vmem:[#allocation10 + $0x78] sm:$0xff]
    %v606 = vld [vmem:[#allocation10 + $0x80] sm:$0xff]
    %v607 = vld [vmem:[#allocation10 + $0x88] sm:$0xff]
    %v608 = vld [vmem:[#allocation10 + $0x90] sm:$0xff]
    %v609 = vld [vmem:[#allocation10 + $0x98] sm:$0xff]
    %v610 = vld [vmem:[#allocation10 + $0xa0] sm:$0xff]
    %v611 = vld [vmem:[#allocation10 + $0xa8] sm:$0xff]
    %v612 = vld [vmem:[#allocation10 + $0xb0] sm:$0xff]
    %v613 = vld [vmem:[#allocation10 + $0xb8] sm:$0xff]
    %v614 = vld [vmem:[#allocation10 + $0xc0] sm:$0xff]
    %v615 = vld [vmem:[#allocation10 + $0xc8] sm:$0xff]
    %v616 = vld [vmem:[#allocation10 + $0xd0] sm:$0xff]
    %v617 = vld [vmem:[#allocation10 + $0xd8] sm:$0xff]
    %v618 = vld [vmem:[#allocation10 + $0xe0] sm:$0xff]
    %v619 = vld [vmem:[#allocation10 + $0xe8] sm:$0xff]
    %v620 = vld [vmem:[#allocation10 + $0xf0] sm:$0xff]
    %v621 = vld [vmem:[#allocation10 + $0xf8] sm:$0xff]
    %v622 = vld [vmem:[%s6] sm:$0x1]
    %v624 = vperm.slane %v622, 0
    %626 = vmatpush.msra.mxu0 %v605
    %627 = vmatpush.msra.mxu0 %v604
    %628 = vmatpush.msra.mxu0 %v603
    %629 = vmatpush.msra.mxu0 %v602
    %630 = vmatpush.msra.mxu0 %v601
    %631 = vmatpush.msra.mxu0 %v600
    %632 = vmatpush.msra.mxu0 %v599
    %633 = vmatpush.msra.mxu0 %v598
    %634 = vmatpush.msra.mxu0 %v597
    %635 = vmatpush.msra.mxu0 %v596
    %636 = vmatpush.msra.mxu0 %v595
    %637 = vmatpush.msra.mxu0 %v594
    %638 = vmatpush.msra.mxu0 %v593
    %639 = vmatpush.msra.mxu0 %v592
    %640 = vmatpush.msra.mxu0 %v591
    %641 = vmatpush.msra.mxu0 %v590
    %642 = vmatmul.f32.gmra.mxu0 %v588
    %v643 = vpop.f32.mrf.mxu0
    %v644 = vadd.f32 %v624, %v643
    %645 = vdwg.mxu0
    %646 = vmatpush.msra.mxu0 %v621
    %647 = vmatpush.msra.mxu0 %v620
    %648 = vmatpush.msra.mxu0 %v619
    %649 = vmatpush.msra.mxu0 %v618
    %650 = vmatpush.msra.mxu0 %v617
    %651 = vmatpush.msra.mxu0 %v616
    %652 = vmatpush.msra.mxu0 %v615
    %653 = vmatpush.msra.mxu0 %v614
    %654 = vmatpush.msra.mxu0 %v613
    %655 = vmatpush.msra.mxu0 %v612
    %656 = vmatpush.msra.mxu0 %v611
    %657 = vmatpush.msra.mxu0 %v610
    %658 = vmatpush.msra.mxu0 %v609
    %659 = vmatpush.msra.mxu0 %v608
    %660 = vmatpush.msra.mxu0 %v607
    %661 = vmatpush.msra.mxu0 %v606
    %662 = vmatmul.f32.gmra.mxu0 %v589
    %v663 = vpop.f32.mrf.mxu0
    %v664 = vadd.f32 %v644, %v663
    %665 = vdwg.mxu0
    %v666 = vmul.f32 %v664, 0.2
    %v667 = vmax.f32 %v664, %v666
    %v668 = vld [vmem:[#allocation11] sm:$0xff]
    %v669 = vld [vmem:[#allocation11 + $0x8] sm:$0xff]
    %v670 = vld [vmem:[#allocation11 + $0x10] sm:$0xff]
    %v671 = vld [vmem:[#allocation11 + $0x18] sm:$0xff]
    %v672 = vld [vmem:[#allocation11 + $0x20] sm:$0xff]
    %v673 = vld [vmem:[#allocation11 + $0x28] sm:$0xff]
    %v674 = vld [vmem:[#allocation11 + $0x30] sm:$0xff]
    %v675 = vld [vmem:[#allocation11 + $0x38] sm:$0xff]
    %v676 = vld [vmem:[#allocation11 + $0x40] sm:$0xff]
    %v677 = vld [vmem:[#allocation11 + $0x48] sm:$0xff]
    %v678 = vld [vmem:[#allocation11 + $0x50] sm:$0xff]
    %v679 = vld [vmem:[#allocation11 + $0x58] sm:$0xff]
    %v680 = vld [vmem:[#allocation11 + $0x60] sm:$0xff]
    %v681 = vld [vmem:[#allocation11 + $0x68] sm:$0xff]
    %v682 = vld [vmem:[#allocation11 + $0x70] sm:$0xff]
    %v683 = vld [vmem:[#allocation11 + $0x78] sm:$0xff]
    %v684 = vld [vmem:[%s8] sm:$0x1]
    %v686 = vperm.slane %v684, 0
    %688 = vmatpush.msra.mxu0 %v683
    %689 = vmatpush.msra.mxu0 %v682
    %690 = vmatpush.msra.mxu0 %v681
    %691 = vmatpush.msra.mxu0 %v680
    %692 = vmatpush.msra.mxu0 %v679
    %693 = vmatpush.msra.mxu0 %v678
    %694 = vmatpush.msra.mxu0 %v677
    %695 = vmatpush.msra.mxu0 %v676
    %696 = vmatpush.msra.mxu0 %v675
    %697 = vmatpush.msra.mxu0 %v674
    %698 = vmatpush.msra.mxu0 %v673
    %699 = vmatpush.msra.mxu0 %v672
    %700 = vmatpush.msra.mxu0 %v671
    %701 = vmatpush.msra.mxu0 %v670
    %702 = vmatpush.msra.mxu0 %v669
    %703 = vmatpush.msra.mxu0 %v668
    %704 = vmatmul.f32.gmra.mxu0 %v667
    %v705 = vpop.f32.mrf.mxu0
    %v706 = vadd.f32 %v686, %v705
    %707 = vdwg.mxu0
    %v708 = vmul.f32 %v706, 0.2
    %v709 = vmax.f32 %v706, %v708
    %v710 = vld [vmem:[#allocation13] sm:$0xff]
    %v711 = vld [vmem:[#allocation13 + $0x8] sm:$0xff]
    %v712 = vld [vmem:[#allocation13 + $0x10] sm:$0xff]
    %v713 = vld [vmem:[#allocation13 + $0x18] sm:$0xff]
    %v714 = vld [vmem:[#allocation13 + $0x20] sm:$0xff]
    %v715 = vld [vmem:[#allocation13 + $0x28] sm:$0xff]
    %v716 = vld [vmem:[#allocation13 + $0x30] sm:$0xff]
    %v717 = vld [vmem:[#allocation13 + $0x38] sm:$0xff]
    %v718 = vld [vmem:[#allocation13 + $0x40] sm:$0xff]
    %v719 = vld [vmem:[#allocation13 + $0x48] sm:$0xff]
    %v720 = vld [vmem:[#allocation13 + $0x50] sm:$0xff]
    %v721 = vld [vmem:[#allocation13 + $0x58] sm:$0xff]
    %v722 = vld [vmem:[#allocation13 + $0x60] sm:$0xff]
    %v723 = vld [vmem:[#allocation13 + $0x68] sm:$0xff]
    %v724 = vld [vmem:[#allocation13 + $0x70] sm:$0xff]
    %v725 = vld [vmem:[#allocation13 + $0x78] sm:$0xff]
    %v726 = vld [vmem:[%s10] sm:$0x1]
    %v728 = vperm.slane %v726, 0
    %730 = vmatpush.msra.mxu0 %v725
    %731 = vmatpush.msra.mxu0 %v724
    %732 = vmatpush.msra.mxu0 %v723
    %733 = vmatpush.msra.mxu0 %v722
    %734 = vmatpush.msra.mxu0 %v721
    %735 = vmatpush.msra.mxu0 %v720
    %736 = vmatpush.msra.mxu0 %v719
    %737 = vmatpush.msra.mxu0 %v718
    %738 = vmatpush.msra.mxu0 %v717
    %739 = vmatpush.msra.mxu0 %v716
    %740 = vmatpush.msra.mxu0 %v715
    %741 = vmatpush.msra.mxu0 %v714
    %742 = vmatpush.msra.mxu0 %v713
    %743 = vmatpush.msra.mxu0 %v712
    %744 = vmatpush.msra.mxu0 %v711
    %745 = vmatpush.msra.mxu0 %v710
    %746 = vmatmul.f32.gmra.mxu0 %v709
    %v747 = vpop.f32.mrf.mxu0
    %v748 = vadd.f32 %v728, %v747
    %749 = vdwg.mxu0
    %v750 = vmul.f32 %v748, 0.2
    %v751 = vmax.f32 %v748, %v750
    %v752 = vld [vmem:[#allocation14] sm:$0xff]
    %v753 = vld [vmem:[#allocation14 + $0x8] sm:$0xff]
    %v754 = vld [vmem:[#allocation14 + $0x10] sm:$0xff]
    %v755 = vld [vmem:[#allocation14 + $0x18] sm:$0xff]
    %v756 = vld [vmem:[#allocation14 + $0x20] sm:$0xff]
    %v757 = vld [vmem:[#allocation14 + $0x28] sm:$0xff]
    %v758 = vld [vmem:[#allocation14 + $0x30] sm:$0xff]
    %v759 = vld [vmem:[#allocation14 + $0x38] sm:$0xff]
    %v760 = vld [vmem:[#allocation14 + $0x40] sm:$0xff]
    %v761 = vld [vmem:[#allocation14 + $0x48] sm:$0xff]
    %v762 = vld [vmem:[#allocation14 + $0x50] sm:$0xff]
    %v763 = vld [vmem:[#allocation14 + $0x58] sm:$0xff]
    %v764 = vld [vmem:[#allocation14 + $0x60] sm:$0xff]
    %v765 = vld [vmem:[#allocation14 + $0x68] sm:$0xff]
    %v766 = vld [vmem:[#allocation14 + $0x70] sm:$0xff]
    %v767 = vld [vmem:[#allocation14 + $0x78] sm:$0xff]
    %v768 = vld [vmem:[%s12] sm:$0x1]
    %v770 = vperm.slane %v768, 0
    %772 = vmatpush.msra.mxu0 %v767
    %773 = vmatpush.msra.mxu0 %v766
    %774 = vmatpush.msra.mxu0 %v765
    %775 = vmatpush.msra.mxu0 %v764
    %776 = vmatpush.msra.mxu0 %v763
    %777 = vmatpush.msra.mxu0 %v762
    %778 = vmatpush.msra.mxu0 %v761
    %779 = vmatpush.msra.mxu0 %v760
    %780 = vmatpush.msra.mxu0 %v759
    %781 = vmatpush.msra.mxu0 %v758
    %782 = vmatpush.msra.mxu0 %v757
    %783 = vmatpush.msra.mxu0 %v756
    %784 = vmatpush.msra.mxu0 %v755
    %785 = vmatpush.msra.mxu0 %v754
    %786 = vmatpush.msra.mxu0 %v753
    %787 = vmatpush.msra.mxu0 %v752
    %788 = vmatmul.f32.gmra.mxu0 %v751
    %v789 = vpop.f32.mrf.mxu0
    %v790 = vadd.f32 %v770, %v789
    %791 = vdwg.mxu0
    %v792 = vmul.f32 %v790, 0.2
    %v793 = vmax.f32 %v790, %v792
    %v794 = vld [vmem:[#allocation16] sm:$0xff]
    %v795 = vld [vmem:[#allocation16 + $0x8] sm:$0xff]
    %v796 = vld [vmem:[#allocation16 + $0x10] sm:$0xff]
    %v797 = vld [vmem:[#allocation16 + $0x18] sm:$0xff]
    %v798 = vld [vmem:[#allocation16 + $0x20] sm:$0xff]
    %v799 = vld [vmem:[#allocation16 + $0x28] sm:$0xff]
    %v800 = vld [vmem:[#allocation16 + $0x30] sm:$0xff]
    %v801 = vld [vmem:[#allocation16 + $0x38] sm:$0xff]
    %v802 = vld [vmem:[#allocation16 + $0x40] sm:$0xff]
    %v803 = vld [vmem:[#allocation16 + $0x48] sm:$0xff]
    %v804 = vld [vmem:[#allocation16 + $0x50] sm:$0xff]
    %v805 = vld [vmem:[#allocation16 + $0x58] sm:$0xff]
    %v806 = vld [vmem:[#allocation16 + $0x60] sm:$0xff]
    %v807 = vld [vmem:[#allocation16 + $0x68] sm:$0xff]
    %v808 = vld [vmem:[#allocation16 + $0x70] sm:$0xff]
    %v809 = vld [vmem:[#allocation16 + $0x78] sm:$0xff]
    %v810 = vld [vmem:[#allocation16 + $0x80] sm:$0xff]
    %v811 = vld [vmem:[#allocation16 + $0x88] sm:$0xff]
    %v812 = vld [vmem:[#allocation16 + $0x90] sm:$0xff]
    %v813 = vld [vmem:[#allocation16 + $0x98] sm:$0xff]
    %v814 = vld [vmem:[#allocation16 + $0xa0] sm:$0xff]
    %v815 = vld [vmem:[#allocation16 + $0xa8] sm:$0xff]
    %v816 = vld [vmem:[#allocation16 + $0xb0] sm:$0xff]
    %v817 = vld [vmem:[#allocation16 + $0xb8] sm:$0xff]
    %v818 = vld [vmem:[#allocation16 + $0xc0] sm:$0xff]
    %v819 = vld [vmem:[#allocation16 + $0xc8] sm:$0xff]
    %v820 = vld [vmem:[#allocation16 + $0xd0] sm:$0xff]
    %v821 = vld [vmem:[#allocation16 + $0xd8] sm:$0xff]
    %v822 = vld [vmem:[#allocation16 + $0xe0] sm:$0xff]
    %v823 = vld [vmem:[#allocation16 + $0xe8] sm:$0xff]
    %v824 = vld [vmem:[#allocation16 + $0xf0] sm:$0xff]
    %v825 = vld [vmem:[#allocation16 + $0xf8] sm:$0xff]
    %v826 = vld [vmem:[%s14] sm:$0x3]
    %v828 = vperm.slane %v826, 0
    %v829 = vperm.slane %v826, 1
    %832 = vmatpush.msra.mxu0 %v824
    %833 = vmatpush.msra.mxu0 %v822
    %834 = vmatpush.msra.mxu0 %v820
    %835 = vmatpush.msra.mxu0 %v818
    %836 = vmatpush.msra.mxu0 %v816
    %837 = vmatpush.msra.mxu0 %v814
    %838 = vmatpush.msra.mxu0 %v812
    %839 = vmatpush.msra.mxu0 %v810
    %840 = vmatpush.msra.mxu0 %v808
    %841 = vmatpush.msra.mxu0 %v806
    %842 = vmatpush.msra.mxu0 %v804
    %843 = vmatpush.msra.mxu0 %v802
    %844 = vmatpush.msra.mxu0 %v800
    %845 = vmatpush.msra.mxu0 %v798
    %846 = vmatpush.msra.mxu0 %v796
    %847 = vmatpush.msra.mxu0 %v794
    %848 = vmatmul.f32.gmra.mxu0 %v793
    %v849 = vpop.f32.mrf.mxu0
    %v850 = vadd.f32 %v828, %v849
    %851 = vdwg.mxu0
    %852 = vmatpush.msra.mxu0 %v825
    %853 = vmatpush.msra.mxu0 %v823
    %854 = vmatpush.msra.mxu0 %v821
    %855 = vmatpush.msra.mxu0 %v819
    %856 = vmatpush.msra.mxu0 %v817
    %857 = vmatpush.msra.mxu0 %v815
    %858 = vmatpush.msra.mxu0 %v813
    %859 = vmatpush.msra.mxu0 %v811
    %860 = vmatpush.msra.mxu0 %v809
    %861 = vmatpush.msra.mxu0 %v807
    %862 = vmatpush.msra.mxu0 %v805
    %863 = vmatpush.msra.mxu0 %v803
    %864 = vmatpush.msra.mxu0 %v801
    %865 = vmatpush.msra.mxu0 %v799
    %866 = vmatpush.msra.mxu0 %v797
    %867 = vmatpush.msra.mxu0 %v795
    %868 = vmatmul.f32.gmra.mxu0 %v793
    %v869 = vpop.f32.mrf.mxu0
    %v870 = vadd.f32 %v829, %v869
    %871 = vdwg.mxu0
    %v872 = vtanh.pop %v850
    %v873 = vtanh.pop %v870
    %874 = vst [vmem:[#allocation17] sm:$0xff] %v872
    %875 = vst [vmem:[#allocation17 + $0x8] sm:$0xff] %v873
    // Predicated region
    $region98: #{tpu_custom_call.1} parent=1 // pred_check
      _
    $region99: #{tpu_custom_call.1} parent=1 // pred_check_branch
      %877 = sbr.rel (0) target = $region101
    $region100: #{tpu_custom_call.1} parent=1 // pred_region
      %879 = vsyncadd [#allocation4], 0
      %s881 = sshll.u32 [#allocation17], 4
      %s882 = int_to_ptr.vmem [resolvable:$true] %s881
      %s883 = sshll.u32 %s15, 4
      %s884 = int_to_ptr.hbm [resolvable:$true] %s883
      %886 = dma.vmem_to_hbm [thread:$0]  %s882, 256, %s884, [#allocation4]
    $region101: #{tpu_custom_call.1} parent=1 // pred_fallthru
      _
    // Predicated region
    $region102: #{tpu_custom_call.1} parent=1 // pred_check
      _
    $region103: #{tpu_custom_call.1} parent=1 // pred_check_branch
      %888 = sbr.rel (0) target = $region105
    $region104: #{tpu_custom_call.1} parent=1 // pred_region
      %890 = dma.done [#allocation4], 256
    $region105: #{tpu_custom_call.1} parent=1 // pred_fallthru
      _
    %891 = vsyncpa [#allocation3], 1
    %892 = vsyncpa [#allocation6], 1
    %893 = vsyncpa [#allocation9], 1
    %894 = vsyncpa [#allocation12], 1
    %895 = vsyncpa [#allocation15], 1
    %896 = vsyncpa [#allocation4], 1

</llo_original>
